<compile_context>
chip_gen: v7x
topology: tpu7x:2x2x1
jax: 0.10.0
libtpu: 0.0.40
codegen_flags: <defaults>
</compile_context>

<pallas_src>
import functools

import jax
import jax.numpy as jnp
from jax.experimental import pallas as pl
from jax.experimental.pallas import tpu as pltpu

_LANE = 128                      # lane width; mean-layer weights padded to it
_H1, _H2, _H3 = 64, 128, 64      # hidden sizes from the PyTorch module
_MAX_TILE_B = 2048               # batch tile cap (multiple of 8)
_SINGLE_STEP_MAX = 512           # above this force grid >= 2 (v7x megacore)
_VMEM_LIMIT_BYTES = 32 * 1024 * 1024
_PRECISION = jax.lax.Precision.HIGHEST   # explicit true-f32 matmuls


def _round_up(n, m):
    return -(-n // m) * m


def _choose_tile_b(batch):
    """Batch tile: single step for small batches, >=2 steps for large ones."""
    if batch <= _SINGLE_STEP_MAX:
        return max(8, _round_up(batch, 8))
    half = _round_up(-(-batch // 2), 8)
    return min(_MAX_TILE_B, half)


def _policy_kernel(x_ref, w1_ref, w2_ref, w3_ref, wm_ref, bias_ref, mean_ref):
    """One batch tile of the MLP.  bias_ref rows: [b1, b2, b3, b_mean(pad)]."""
    a = mean_ref.shape[-1]                       # action_dim (static)
    x = x_ref[...]

    h1 = jnp.dot(x, w1_ref[...], preferred_element_type=jnp.float32,
                 precision=_PRECISION)
    h1 = jnp.maximum(h1 + bias_ref[0:1, :_H1], 0.0)

    h2 = jnp.dot(h1, w2_ref[...], preferred_element_type=jnp.float32,
                 precision=_PRECISION)
    h2 = jnp.maximum(h2 + bias_ref[1:2, :_H2], 0.0)

    h3 = jnp.dot(h2, w3_ref[...], preferred_element_type=jnp.float32,
                 precision=_PRECISION)
    h3 = jnp.maximum(h3 + bias_ref[2:3, :_H3], 0.0)

    # Mean layer: weights are lane-padded (H3, 128) for the MXU; only the
    # first `a` lanes of the result are stored, so padding never leaks.
    m = jnp.dot(h3, wm_ref[...], preferred_element_type=jnp.float32,
                precision=_PRECISION)
    mean_ref[...] = jnp.tanh(m[:, :a] + bias_ref[3:4, :a]).astype(mean_ref.dtype)


@functools.partial(jax.jit, static_argnames=("tile_b", "action_dim"))
def _forward_jit(x, w1, w2, w3, wm_pad, bias_slab, *, tile_b, action_dim):
    batch, state_dim = x.shape
    pad = (-batch) % tile_b
    if pad:
        x = jnp.pad(x, ((0, pad), (0, 0)))
    padded_batch = batch + pad
    grid = (padded_batch // tile_b,)

    def rep(shape):  # weight/bias blocks replicated across the batch grid
        return pl.BlockSpec(shape, lambda i: (0, 0))

    mean = pl.pallas_call(
        _policy_kernel,
        out_shape=jax.ShapeDtypeStruct((padded_batch, action_dim), jnp.float32),
        grid=grid,
        in_specs=[
            pl.BlockSpec((tile_b, state_dim), lambda i: (i, 0)),
            rep(w1.shape),
            rep(w2.shape),
            rep(w3.shape),
            rep(wm_pad.shape),
            rep(bias_slab.shape),
        ],
        out_specs=pl.BlockSpec((tile_b, action_dim), lambda i: (i, 0)),
        compiler_params=pltpu.CompilerParams(
            dimension_semantics=("parallel",),
            vmem_limit_bytes=_VMEM_LIMIT_BYTES),
    )(x, w1, w2, w3, wm_pad, bias_slab)

    return mean[:batch] if pad else mean


def linear_network_forward(x, kparams, tile_b=None):
    """Forward pass. x: (batch, state_dim) f32. kparams: from prepare_params().

    Returns (mean (batch, action_dim), std (action_dim,)).
    """
    batch = x.shape[0]
    if tile_b is None:
        tile_b = _choose_tile_b(batch)
    action_dim = int(kparams["std"].shape[0])
    mean = _forward_jit(x, kparams["w1"], kparams["w2"], kparams["w3"],
                        kparams["wm_pad"], kparams["bias_slab"],
                        tile_b=tile_b, action_dim=action_dim)
    return mean, kparams["std"]            # std precomputed: param_std=True


def prepare_params(params):
    """One-time conversion of PyTorch-layout params to kernel layout:
    weights transposed to (in, out), mean layer zero-padded to 128 lanes,
    biases packed into one (4, 128) slab, std = exp(log_std) precomputed."""
    action_dim = params["mean_w"].shape[0]
    assert action_dim <= _LANE

    wm_pad = jnp.zeros((_H3, _LANE), jnp.float32)
    wm_pad = wm_pad.at[:, :action_dim].set(params["mean_w"].T)

    bias = jnp.zeros((4, _LANE), jnp.float32)
    bias = bias.at[0, :_H1].set(params["fc1_b"])
    bias = bias.at[1, :_H2].set(params["fc2_b"])
    bias = bias.at[2, :_H3].set(params["fc3_b"])
    bias = bias.at[3, :action_dim].set(params["mean_b"])

    return {
        "w1": jnp.asarray(params["fc1_w"].T, jnp.float32),
        "w2": jnp.asarray(params["fc2_w"].T, jnp.float32),
        "w3": jnp.asarray(params["fc3_w"].T, jnp.float32),
        "wm_pad": wm_pad,
        "bias_slab": bias,
        "std": jnp.exp(jnp.asarray(params["log_std"], jnp.float32)),
        "log_std": jnp.asarray(params["log_std"], jnp.float32),
    }


def init_params(key, state_dim, action_dim):
    """Matches init_weights(): kaiming_normal weights (std = sqrt(2/fan_in)),
    zero biases, zero log_std.  PyTorch layout: weights (out, in)."""
    ks = jax.random.split(key, 4)

    def kaiming(k, out_f, in_f):
        return (jax.random.normal(k, (out_f, in_f), jnp.float32)
                * jnp.sqrt(2.0 / in_f))

    return {
        "fc1_w": kaiming(ks[0], _H1, state_dim),
        "fc1_b": jnp.zeros((_H1,), jnp.float32),
        "fc2_w": kaiming(ks[1], _H2, _H1),
        "fc2_b": jnp.zeros((_H2,), jnp.float32),
        "fc3_w": kaiming(ks[2], _H3, _H2),
        "fc3_b": jnp.zeros((_H3,), jnp.float32),
        "mean_w": kaiming(ks[3], action_dim, _H3),
        "mean_b": jnp.zeros((action_dim,), jnp.float32),
        "log_std": jnp.zeros((action_dim,), jnp.float32),
    }


def _reference_forward(x, p):
    """Pure-JAX reference (PyTorch-layout params), true f32 matmuls."""
    hi = jax.lax.Precision.HIGHEST
    h = jax.nn.relu(jnp.dot(x, p["fc1_w"].T, precision=hi) + p["fc1_b"])
    h = jax.nn.relu(jnp.dot(h, p["fc2_w"].T, precision=hi) + p["fc2_b"])
    h = jax.nn.relu(jnp.dot(h, p["fc3_w"].T, precision=hi) + p["fc3_b"])
    mean = jnp.tanh(jnp.dot(h, p["mean_w"].T, precision=hi) + p["mean_b"])
    std = jnp.exp(p["log_std"])
    return mean, std


if __name__ == "__main__":
    # LunarLanderContinuous: state_dim=8, action_dim=2.
    state_dim, action_dim, batch = 8, 2, 4

    key = jax.random.PRNGKey(0)
    k_params, k_x, k_xb = jax.random.split(key, 3)
    params = init_params(k_params, state_dim, action_dim)
    kparams = prepare_params(params)

    # Small (latency-path) batch: single grid step.
    x = jax.random.normal(k_x, (batch, state_dim), jnp.float32)
    mean, std = linear_network_forward(x, kparams)
    jax.block_until_ready((mean, std))

    ref_mean, ref_std = _reference_forward(x, params)
    assert mean.shape == (batch, action_dim)
    assert std.shape == (action_dim,)
    assert jnp.allclose(mean, ref_mean, atol=1e-5, rtol=1e-5)
    assert jnp.allclose(std, ref_std, atol=1e-6, rtol=1e-6)

    # Larger, non-divisible batch exercises padding + the >=2-step,
    # megacore-parallel grid path.
    big_batch = 1000
    xb = jax.random.normal(k_xb, (big_batch, state_dim), jnp.float32)
    mean_b, std_b = linear_network_forward(xb, kparams)
    jax.block_until_ready((mean_b, std_b))
    ref_mean_b, _ = _reference_forward(xb, params)
    assert mean_b.shape == (big_batch, action_dim)
    assert jnp.allclose(mean_b, ref_mean_b, atol=1e-5, rtol=1e-5)

    print("KERNEL_OK")
</pallas_src>

<mosaic_0001>
module attributes {stable_mosaic.version = 11 : i64} {
  func.func @_policy_kernel(%arg0: i32, %arg1: memref<8x8xf32, #tpu.memory_space<vmem>>, %arg2: memref<8x64xf32, #tpu.memory_space<vmem>>, %arg3: memref<64x128xf32, #tpu.memory_space<vmem>>, %arg4: memref<128x64xf32, #tpu.memory_space<vmem>>, %arg5: memref<64x128xf32, #tpu.memory_space<vmem>>, %arg6: memref<4x128xf32, #tpu.memory_space<vmem>>, %arg7: memref<8x2xf32, #tpu.memory_space<vmem>>) attributes {dimension_semantics = [#tpu.dimension_semantics<parallel>], iteration_bounds = array<i64: 1>, scalar_prefetch = 0 : i64, scratch_operands = 0 : i64, tpu.core_type = #tpu.core_type<tc>, window_params = [{transform_indices = @transform_0, window_bounds = array<i64: 8, 8>}, {pipeline_mode = #tpu.pipeline_mode<synchronous>, transform_indices = @transform_1, window_bounds = array<i64: 8, 64>}, {pipeline_mode = #tpu.pipeline_mode<synchronous>, transform_indices = @transform_2, window_bounds = array<i64: 64, 128>}, {pipeline_mode = #tpu.pipeline_mode<synchronous>, transform_indices = @transform_3, window_bounds = array<i64: 128, 64>}, {pipeline_mode = #tpu.pipeline_mode<synchronous>, transform_indices = @transform_4, window_bounds = array<i64: 64, 128>}, {pipeline_mode = #tpu.pipeline_mode<synchronous>, transform_indices = @transform_5, window_bounds = array<i64: 4, 128>}, {transform_indices = @transform_6, window_bounds = array<i64: 8, 2>}]} {
    %c0 = arith.constant 0 : index
    %c0_0 = arith.constant 0 : index
    %0 = vector.load %arg1[%c0, %c0_0] : memref<8x8xf32, #tpu.memory_space<vmem>>, vector<8x8xf32>
    %c0_1 = arith.constant 0 : index
    %c0_2 = arith.constant 0 : index
    %1 = vector.load %arg2[%c0_1, %c0_2] : memref<8x64xf32, #tpu.memory_space<vmem>>, vector<8x64xf32>
    %cst = arith.constant dense<0.000000e+00> : vector<8x64xf32>
    %2 = tpu.matmul %0, %1, %cst {dimension_numbers = #tpu.dot_dimension_numbers<[1], [0], [0], [1], [0, 0, 1, 1], [], []>, precision = #tpu.contract_precision<fp32>} : vector<8x8xf32>, vector<8x64xf32>, vector<8x64xf32> -> vector<8x64xf32>
    %c0_3 = arith.constant 0 : index
    %c0_4 = arith.constant 0 : index
    %3 = vector.load %arg6[%c0_3, %c0_4] : memref<4x128xf32, #tpu.memory_space<vmem>>, vector<1x64xf32>
    %4 = vector.broadcast %3 : vector<1x64xf32> to vector<8x64xf32>
    %5 = arith.addf %2, %4 : vector<8x64xf32>
    %cst_5 = arith.constant 0.000000e+00 : f32
    %6 = vector.broadcast %cst_5 : f32 to vector<8x64xf32>
    %7 = arith.maximumf %5, %6 : vector<8x64xf32>
    %c0_6 = arith.constant 0 : index
    %c0_7 = arith.constant 0 : index
    %8 = vector.load %arg3[%c0_6, %c0_7] : memref<64x128xf32, #tpu.memory_space<vmem>>, vector<64x128xf32>
    %cst_8 = arith.constant dense<0.000000e+00> : vector<8x128xf32>
    %9 = tpu.matmul %7, %8, %cst_8 {dimension_numbers = #tpu.dot_dimension_numbers<[1], [0], [0], [1], [0, 0, 1, 1], [], []>, precision = #tpu.contract_precision<fp32>} : vector<8x64xf32>, vector<64x128xf32>, vector<8x128xf32> -> vector<8x128xf32>
    %c1 = arith.constant 1 : index
    %c0_9 = arith.constant 0 : index
    %10 = vector.load %arg6[%c1, %c0_9] : memref<4x128xf32, #tpu.memory_space<vmem>>, vector<1x128xf32>
    %11 = vector.broadcast %10 : vector<1x128xf32> to vector<8x128xf32>
    %12 = arith.addf %9, %11 : vector<8x128xf32>
    %cst_10 = arith.constant 0.000000e+00 : f32
    %13 = vector.broadcast %cst_10 : f32 to vector<8x128xf32>
    %14 = arith.maximumf %12, %13 : vector<8x128xf32>
    %c0_11 = arith.constant 0 : index
    %c0_12 = arith.constant 0 : index
    %15 = vector.load %arg4[%c0_11, %c0_12] : memref<128x64xf32, #tpu.memory_space<vmem>>, vector<128x64xf32>
    %cst_13 = arith.constant dense<0.000000e+00> : vector<8x64xf32>
    %16 = tpu.matmul %14, %15, %cst_13 {dimension_numbers = #tpu.dot_dimension_numbers<[1], [0], [0], [1], [0, 0, 1, 1], [], []>, precision = #tpu.contract_precision<fp32>} : vector<8x128xf32>, vector<128x64xf32>, vector<8x64xf32> -> vector<8x64xf32>
    %c2 = arith.constant 2 : index
    %c0_14 = arith.constant 0 : index
    %17 = vector.load %arg6[%c2, %c0_14] : memref<4x128xf32, #tpu.memory_space<vmem>>, vector<1x64xf32>
    %18 = vector.broadcast %17 : vector<1x64xf32> to vector<8x64xf32>
    %19 = arith.addf %16, %18 : vector<8x64xf32>
    %cst_15 = arith.constant 0.000000e+00 : f32
    %20 = vector.broadcast %cst_15 : f32 to vector<8x64xf32>
    %21 = arith.maximumf %19, %20 : vector<8x64xf32>
    %c0_16 = arith.constant 0 : index
    %c0_17 = arith.constant 0 : index
    %22 = vector.load %arg5[%c0_16, %c0_17] : memref<64x128xf32, #tpu.memory_space<vmem>>, vector<64x128xf32>
    %cst_18 = arith.constant dense<0.000000e+00> : vector<8x128xf32>
    %23 = tpu.matmul %21, %22, %cst_18 {dimension_numbers = #tpu.dot_dimension_numbers<[1], [0], [0], [1], [0, 0, 1, 1], [], []>, precision = #tpu.contract_precision<fp32>} : vector<8x64xf32>, vector<64x128xf32>, vector<8x128xf32> -> vector<8x128xf32>
    %24 = vector.extract_strided_slice %23 {offsets = [0, 0], sizes = [8, 2], strides = [1, 1]} : vector<8x128xf32> to vector<8x2xf32>
    %c3 = arith.constant 3 : index
    %c0_19 = arith.constant 0 : index
    %25 = vector.load %arg6[%c3, %c0_19] : memref<4x128xf32, #tpu.memory_space<vmem>>, vector<1x2xf32>
    %26 = vector.broadcast %25 : vector<1x2xf32> to vector<8x2xf32>
    %27 = arith.addf %24, %26 : vector<8x2xf32>
    %28 = math.tanh %27 : vector<8x2xf32>
    %c0_20 = arith.constant 0 : index
    %c0_21 = arith.constant 0 : index
    %29 = vector.load %arg7[%c0_20, %c0_21] : memref<8x2xf32, #tpu.memory_space<vmem>>, vector<8x2xf32>
    tpu.vector_store %arg7[%c0_20, %c0_21], %28 {strides = array<i32>} : memref<8x2xf32, #tpu.memory_space<vmem>>, vector<8x2xf32>,
    return
  }
  func.func @transform_0(%arg0: i32) -> (i32, i32) {
    %c0_i32 = arith.constant 0 : i32
    %c0_i32_0 = arith.constant 0 : i32
    return %arg0, %c0_i32 : i32, i32
  }
  func.func @transform_1(%arg0: i32) -> (i32, i32) {
    %c0_i32 = arith.constant 0 : i32
    %c0_i32_0 = arith.constant 0 : i32
    %c0_i32_1 = arith.constant 0 : i32
    return %c0_i32, %c0_i32_0 : i32, i32
  }
  func.func @transform_2(%arg0: i32) -> (i32, i32) {
    %c0_i32 = arith.constant 0 : i32
    %c0_i32_0 = arith.constant 0 : i32
    %c0_i32_1 = arith.constant 0 : i32
    return %c0_i32, %c0_i32_0 : i32, i32
  }
  func.func @transform_3(%arg0: i32) -> (i32, i32) {
    %c0_i32 = arith.constant 0 : i32
    %c0_i32_0 = arith.constant 0 : i32
    %c0_i32_1 = arith.constant 0 : i32
    return %c0_i32, %c0_i32_0 : i32, i32
  }
  func.func @transform_4(%arg0: i32) -> (i32, i32) {
    %c0_i32 = arith.constant 0 : i32
    %c0_i32_0 = arith.constant 0 : i32
    %c0_i32_1 = arith.constant 0 : i32
    return %c0_i32, %c0_i32_0 : i32, i32
  }
  func.func @transform_5(%arg0: i32) -> (i32, i32) {
    %c0_i32 = arith.constant 0 : i32
    %c0_i32_0 = arith.constant 0 : i32
    %c0_i32_1 = arith.constant 0 : i32
    return %c0_i32, %c0_i32_0 : i32, i32
  }
  func.func @transform_6(%arg0: i32) -> (i32, i32) {
    %c0_i32 = arith.constant 0 : i32
    %c0_i32_0 = arith.constant 0 : i32
    return %arg0, %c0_i32 : i32, i32
  }
}

</mosaic_0001>

<llo_original>
// kernel: _forward_jit.1
$region0: #{_forward_jit.1}
  #allocation0 [shape = 'u32[]', space=smem, size = 0x4, offset = 0x4, fixed_abs, tag = 'smem constant byte address 0x4 - core index']
  #allocation1 [shape = 'u32[144,128]{1,0:T(1,128)}', space=vmem, size = 0x12000, scoped, tag = 'internal scratch']
  %s0 = inlined_call_operand.vmem [shape: f32[8,8], index: 0, kind: input, shape index: {}]
  %s1 = inlined_call_operand.vmem [shape: f32[8,64], index: 1, kind: input, shape index: {}]
  %s2 = inlined_call_operand.vmem [shape: f32[64,128], index: 2, kind: input, shape index: {}]
  %s3 = inlined_call_operand.vmem [shape: f32[128,64], index: 3, kind: input, shape index: {}]
  %s4 = inlined_call_operand.vmem [shape: f32[64,128], index: 4, kind: input, shape index: {}]
  %s5 = inlined_call_operand.vmem [shape: f32[4,128], index: 5, kind: input, shape index: {}]
  %s6 = inlined_call_operand.vmem [shape: f32[8,2], index: 6, kind: output, shape index: {}]
  %s7 = sld [smem:[#allocation0]]
  $region34: #{_forward_jit.1} parent=0
    _
  %s9 = ssub.s32 1, %s7
  %s10 = scalar_select 0, %s9, %s7
  // Predicated region
  $region2: #{_forward_jit.1} parent=0 // pred_check
    _
  $region3: #{_forward_jit.1} parent=0 // pred_check_branch
    %12 = sbr.rel (0) target = $region5
  $region4: #{_forward_jit.1} parent=0 // pred_region
    _
  $region5: #{_forward_jit.1} parent=0 // pred_fallthru
    _
  // Predicated region
  $region6: #{_forward_jit.1} parent=0 // pred_check
    _
  $region7: #{_forward_jit.1} parent=0 // pred_check_branch
    %14 = sbr.rel (0) target = $region9
  $region8: #{_forward_jit.1} parent=0 // pred_region
    _
  $region9: #{_forward_jit.1} parent=0 // pred_fallthru
    _
  // Predicated region
  $region10: #{_forward_jit.1} parent=0 // pred_check
    _
  $region11: #{_forward_jit.1} parent=0 // pred_check_branch
    %16 = sbr.rel (0) target = $region13
  $region12: #{_forward_jit.1} parent=0 // pred_region
    _
  $region13: #{_forward_jit.1} parent=0 // pred_fallthru
    _
  // Predicated region
  $region14: #{_forward_jit.1} parent=0 // pred_check
    _
  $region15: #{_forward_jit.1} parent=0 // pred_check_branch
    %18 = sbr.rel (0) target = $region17
  $region16: #{_forward_jit.1} parent=0 // pred_region
    _
  $region17: #{_forward_jit.1} parent=0 // pred_fallthru
    _
  // Predicated region
  $region18: #{_forward_jit.1} parent=0 // pred_check
    _
  $region19: #{_forward_jit.1} parent=0 // pred_check_branch
    %20 = sbr.rel (0) target = $region21
  $region20: #{_forward_jit.1} parent=0 // pred_region
    _
  $region21: #{_forward_jit.1} parent=0 // pred_fallthru
    _
  // Predicated region
  $region22: #{_forward_jit.1} parent=0 // pred_check
    _
  $region23: #{_forward_jit.1} parent=0 // pred_check_branch
    %22 = sbr.rel (0) target = $region25
  $region24: #{_forward_jit.1} parent=0 // pred_region
    _
  $region25: #{_forward_jit.1} parent=0 // pred_fallthru
    _
  %v23 = vld [vmem:[%s0] sm:$0xff]
  %v24 = vld [vmem:[%s1] sm:$0xff]
  %v25 = vld [vmem:[%s5] sm:$0x1]
  %v26 = vlaneseq
  %v27 = vshrl.u32 %v26, 7
  %v28 = vsub.s32 0, %v27
  %v29 = vrot.slane %v25, %v28
  %vm30 = vcmask 64512
  %v32 = vsel %vm30, %v23, 0
  %34 = vmatprep.subr.mxu0 0.0
  %v35 = vand.u32 %v24, 4294901760
  %36 = vmatpush1.msra.mxu0 %v35
  %37 = vmatprep.subr.mxu0 0.0
  %38 = vmatpush1.msra.mxu0 0.0
  %39 = vmatprep.subr.mxu0 0.0
  %40 = vmatpush1.msra.mxu0 0.0
  %41 = vmatprep.subr.mxu0 0.0
  %42 = vmatpush1.msra.mxu0 0.0
  %43 = vmatprep.subr.mxu0 0.0
  %44 = vmatpush1.msra.mxu0 0.0
  %45 = vmatprep.subr.mxu0 0.0
  %46 = vmatpush1.msra.mxu0 0.0
  %47 = vmatprep.subr.mxu0 0.0
  %48 = vmatpush1.msra.mxu0 0.0
  %49 = vmatprep.subr.mxu0 0.0
  %50 = vmatpush1.msra.mxu0 0.0
  %51 = vmatprep.subr.mxu0 0.0
  %52 = vmatpush1.msra.mxu0 0.0
  %53 = vmatprep.subr.mxu0 0.0
  %54 = vmatpush1.msra.mxu0 0.0
  %55 = vmatprep.subr.mxu0 0.0
  %56 = vmatpush1.msra.mxu0 0.0
  %57 = vmatprep.subr.mxu0 0.0
  %58 = vmatpush1.msra.mxu0 0.0
  %59 = vmatprep.subr.mxu0 0.0
  %60 = vmatpush1.msra.mxu0 0.0
  %61 = vmatprep.subr.mxu0 0.0
  %62 = vmatpush1.msra.mxu0 0.0
  %63 = vmatprep.subr.mxu0 0.0
  %64 = vmatpush1.msra.mxu0 0.0
  %65 = vmatprep.subr.mxu0 0.0
  %66 = vmatpush1.msra.mxu0 0.0
  %67 = vmatprep.subr.mxu0 0.0
  %68 = vmatpush1.msra.mxu0 0.0
  %69 = vmatprep.subr.mxu0 0.0
  %70 = vmatpush1.msra.mxu0 0.0
  %71 = vmatprep.subr.mxu0 0.0
  %72 = vmatpush1.msra.mxu0 0.0
  %73 = vmatprep.subr.mxu0 0.0
  %74 = vmatpush1.msra.mxu0 0.0
  %75 = vmatprep.subr.mxu0 0.0
  %76 = vmatpush1.msra.mxu0 0.0
  %77 = vmatprep.subr.mxu0 0.0
  %78 = vmatpush1.msra.mxu0 0.0
  %79 = vmatprep.subr.mxu0 0.0
  %80 = vmatpush1.msra.mxu0 0.0
  %81 = vmatprep.subr.mxu0 0.0
  %82 = vmatpush1.msra.mxu0 0.0
  %83 = vmatprep.subr.mxu0 0.0
  %84 = vmatpush1.msra.mxu0 0.0
  %85 = vmatprep.subr.mxu0 0.0
  %86 = vmatpush1.msra.mxu0 0.0
  %87 = vmatprep.subr.mxu0 0.0
  %88 = vmatpush1.msra.mxu0 0.0
  %89 = vmatprep.subr.mxu0 0.0
  %90 = vmatpush1.msra.mxu0 0.0
  %91 = vmatprep.subr.mxu0 0.0
  %92 = vmatpush1.msra.mxu0 0.0
  %93 = vmatprep.subr.mxu0 0.0
  %94 = vmatpush1.msra.mxu0 0.0
  %95 = vmatprep.subr.mxu0 0.0
  %96 = vmatpush1.msra.mxu0 0.0
  %97 = vmatprep.subr.mxu0 0.0
  %98 = vmatpush1.msra.mxu0 0.0
  %99 = vmatprep.mubr.f32.mxu0 0.0
  %v100 = vand.u32 %v32, 4294901760
  %v101 = vsub.f32 %v32, %v100
  %v102 = vand.u32 %v101, 4294901760
  %v103 = vsub.f32 %v101, %v102
  %v104 = vand.u32 %v103, 4294901760
  %105 = vmatmul.mubr.f32.gmra.mrb[0].mxu0 %v104
  %v106 = vpop.f32.mrb[0].mxu0
  %v107 = vadd.f32 %v29, %v106
  %v108 = vpop.f32.mrb[0].mxu0
  %109 = vdwg.mxu0
  %110 = vmatprep.subr.mxu0 0.0
  %v111 = vand.u32 %v24, 4294901760
  %v112 = vsub.f32 %v24, %v111
  %v113 = vand.u32 %v112, 4294901760
  %v114 = vsub.f32 %v112, %v113
  %v115 = vand.u32 %v114, 4294901760
  %116 = vmatpush1.msra.mxu0 %v115
  %117 = vmatprep.subr.mxu0 0.0
  %118 = vmatpush1.msra.mxu0 0.0
  %119 = vmatprep.subr.mxu0 0.0
  %120 = vmatpush1.msra.mxu0 0.0
  %121 = vmatprep.subr.mxu0 0.0
  %122 = vmatpush1.msra.mxu0 0.0
  %123 = vmatprep.subr.mxu0 0.0
  %124 = vmatpush1.msra.mxu0 0.0
  %125 = vmatprep.subr.mxu0 0.0
  %126 = vmatpush1.msra.mxu0 0.0
  %127 = vmatprep.subr.mxu0 0.0
  %128 = vmatpush1.msra.mxu0 0.0
  %129 = vmatprep.subr.mxu0 0.0
  %130 = vmatpush1.msra.mxu0 0.0
  %131 = vmatprep.subr.mxu0 0.0
  %132 = vmatpush1.msra.mxu0 0.0
  %133 = vmatprep.subr.mxu0 0.0
  %134 = vmatpush1.msra.mxu0 0.0
  %135 = vmatprep.subr.mxu0 0.0
  %136 = vmatpush1.msra.mxu0 0.0
  %137 = vmatprep.subr.mxu0 0.0
  %138 = vmatpush1.msra.mxu0 0.0
  %139 = vmatprep.subr.mxu0 0.0
  %140 = vmatpush1.msra.mxu0 0.0
  %141 = vmatprep.subr.mxu0 0.0
  %142 = vmatpush1.msra.mxu0 0.0
  %143 = vmatprep.subr.mxu0 0.0
  %144 = vmatpush1.msra.mxu0 0.0
  %145 = vmatprep.subr.mxu0 0.0
  %146 = vmatpush1.msra.mxu0 0.0
  %147 = vmatprep.subr.mxu0 0.0
  %148 = vmatpush1.msra.mxu0 0.0
  %149 = vmatprep.subr.mxu0 0.0
  %150 = vmatpush1.msra.mxu0 0.0
  %151 = vmatprep.subr.mxu0 0.0
  %152 = vmatpush1.msra.mxu0 0.0
  %153 = vmatprep.subr.mxu0 0.0
  %154 = vmatpush1.msra.mxu0 0.0
  %155 = vmatprep.subr.mxu0 0.0
  %156 = vmatpush1.msra.mxu0 0.0
  %157 = vmatprep.subr.mxu0 0.0
  %158 = vmatpush1.msra.mxu0 0.0
  %159 = vmatprep.subr.mxu0 0.0
  %160 = vmatpush1.msra.mxu0 0.0
  %161 = vmatprep.subr.mxu0 0.0
  %162 = vmatpush1.msra.mxu0 0.0
  %163 = vmatprep.subr.mxu0 0.0
  %164 = vmatpush1.msra.mxu0 0.0
  %165 = vmatprep.subr.mxu0 0.0
  %166 = vmatpush1.msra.mxu0 0.0
  %167 = vmatprep.subr.mxu0 0.0
  %168 = vmatpush1.msra.mxu0 0.0
  %169 = vmatprep.subr.mxu0 0.0
  %170 = vmatpush1.msra.mxu0 0.0
  %171 = vmatprep.subr.mxu0 0.0
  %172 = vmatpush1.msra.mxu0 0.0
  %173 = vmatprep.subr.mxu0 0.0
  %174 = vmatpush1.msra.mxu0 0.0
  %175 = vmatprep.subr.mxu0 0.0
  %176 = vmatpush1.msra.mxu0 0.0
  %177 = vmatprep.subr.mxu0 0.0
  %178 = vmatpush1.msra.mxu0 0.0
  %179 = vmatprep.mubr.f32.mxu0 0.0
  %v180 = vand.u32 %v32, 4294901760
  %181 = vmatmul.mubr.f32.gmra.mrb[0].mxu0 %v180
  %v182 = vpop.f32.mrb[0].mxu0
  %v183 = vadd.f32 %v107, %v182
  %v184 = vpop.f32.mrb[0].mxu0
  %185 = vdwg.mxu0
  %186 = vmatprep.subr.mxu0 0.0
  %v187 = vand.u32 %v24, 4294901760
  %v188 = vsub.f32 %v24, %v187
  %189 = vmatpush1.msra.mxu0 %v188
  %190 = vmatprep.subr.mxu0 0.0
  %191 = vmatpush1.msra.mxu0 0.0
  %192 = vmatprep.subr.mxu0 0.0
  %193 = vmatpush1.msra.mxu0 0.0
  %194 = vmatprep.subr.mxu0 0.0
  %195 = vmatpush1.msra.mxu0 0.0
  %196 = vmatprep.subr.mxu0 0.0
  %197 = vmatpush1.msra.mxu0 0.0
  %198 = vmatprep.subr.mxu0 0.0
  %199 = vmatpush1.msra.mxu0 0.0
  %200 = vmatprep.subr.mxu0 0.0
  %201 = vmatpush1.msra.mxu0 0.0
  %202 = vmatprep.subr.mxu0 0.0
  %203 = vmatpush1.msra.mxu0 0.0
  %204 = vmatprep.subr.mxu0 0.0
  %205 = vmatpush1.msra.mxu0 0.0
  %206 = vmatprep.subr.mxu0 0.0
  %207 = vmatpush1.msra.mxu0 0.0
  %208 = vmatprep.subr.mxu0 0.0
  %209 = vmatpush1.msra.mxu0 0.0
  %210 = vmatprep.subr.mxu0 0.0
  %211 = vmatpush1.msra.mxu0 0.0
  %212 = vmatprep.subr.mxu0 0.0
  %213 = vmatpush1.msra.mxu0 0.0
  %214 = vmatprep.subr.mxu0 0.0
  %215 = vmatpush1.msra.mxu0 0.0
  %216 = vmatprep.subr.mxu0 0.0
  %217 = vmatpush1.msra.mxu0 0.0
  %218 = vmatprep.subr.mxu0 0.0
  %219 = vmatpush1.msra.mxu0 0.0
  %220 = vmatprep.subr.mxu0 0.0
  %221 = vmatpush1.msra.mxu0 0.0
  %222 = vmatprep.subr.mxu0 0.0
  %223 = vmatpush1.msra.mxu0 0.0
  %224 = vmatprep.subr.mxu0 0.0
  %225 = vmatpush1.msra.mxu0 0.0
  %226 = vmatprep.subr.mxu0 0.0
  %227 = vmatpush1.msra.mxu0 0.0
  %228 = vmatprep.subr.mxu0 0.0
  %229 = vmatpush1.msra.mxu0 0.0
  %230 = vmatprep.subr.mxu0 0.0
  %231 = vmatpush1.msra.mxu0 0.0
  %232 = vmatprep.subr.mxu0 0.0
  %233 = vmatpush1.msra.mxu0 0.0
  %234 = vmatprep.subr.mxu0 0.0
  %235 = vmatpush1.msra.mxu0 0.0
  %236 = vmatprep.subr.mxu0 0.0
  %237 = vmatpush1.msra.mxu0 0.0
  %238 = vmatprep.subr.mxu0 0.0
  %239 = vmatpush1.msra.mxu0 0.0
  %240 = vmatprep.subr.mxu0 0.0
  %241 = vmatpush1.msra.mxu0 0.0
  %242 = vmatprep.subr.mxu0 0.0
  %243 = vmatpush1.msra.mxu0 0.0
  %244 = vmatprep.subr.mxu0 0.0
  %245 = vmatpush1.msra.mxu0 0.0
  %246 = vmatprep.subr.mxu0 0.0
  %247 = vmatpush1.msra.mxu0 0.0
  %248 = vmatprep.subr.mxu0 0.0
  %249 = vmatpush1.msra.mxu0 0.0
  %250 = vmatprep.subr.mxu0 0.0
  %251 = vmatpush1.msra.mxu0 0.0
  %252 = vmatprep.mubr.f32.mxu0 0.0
  %v253 = vand.u32 %v32, 4294901760
  %v254 = vsub.f32 %v32, %v253
  %255 = vmatmul.mubr.f32.gmra.mrb[0].mxu0 %v254
  %v256 = vpop.f32.mrb[0].mxu0
  %v257 = vadd.f32 %v183, %v256
  %v258 = vpop.f32.mrb[0].mxu0
  %259 = vdwg.mxu0
  %260 = vmatprep.subr.mxu0 0.0
  %v261 = vand.u32 %v24, 4294901760
  %262 = vmatpush1.msra.mxu0 %v261
  %263 = vmatprep.subr.mxu0 0.0
  %264 = vmatpush1.msra.mxu0 0.0
  %265 = vmatprep.subr.mxu0 0.0
  %266 = vmatpush1.msra.mxu0 0.0
  %267 = vmatprep.subr.mxu0 0.0
  %268 = vmatpush1.msra.mxu0 0.0
  %269 = vmatprep.subr.mxu0 0.0
  %270 = vmatpush1.msra.mxu0 0.0
  %271 = vmatprep.subr.mxu0 0.0
  %272 = vmatpush1.msra.mxu0 0.0
  %273 = vmatprep.subr.mxu0 0.0
  %274 = vmatpush1.msra.mxu0 0.0
  %275 = vmatprep.subr.mxu0 0.0
  %276 = vmatpush1.msra.mxu0 0.0
  %277 = vmatprep.subr.mxu0 0.0
  %278 = vmatpush1.msra.mxu0 0.0
  %279 = vmatprep.subr.mxu0 0.0
  %280 = vmatpush1.msra.mxu0 0.0
  %281 = vmatprep.subr.mxu0 0.0
  %282 = vmatpush1.msra.mxu0 0.0
  %283 = vmatprep.subr.mxu0 0.0
  %284 = vmatpush1.msra.mxu0 0.0
  %285 = vmatprep.subr.mxu0 0.0
  %286 = vmatpush1.msra.mxu0 0.0
  %287 = vmatprep.subr.mxu0 0.0
  %288 = vmatpush1.msra.mxu0 0.0
  %289 = vmatprep.subr.mxu0 0.0
  %290 = vmatpush1.msra.mxu0 0.0
  %291 = vmatprep.subr.mxu0 0.0
  %292 = vmatpush1.msra.mxu0 0.0
  %293 = vmatprep.subr.mxu0 0.0
  %294 = vmatpush1.msra.mxu0 0.0
  %295 = vmatprep.subr.mxu0 0.0
  %296 = vmatpush1.msra.mxu0 0.0
  %297 = vmatprep.subr.mxu0 0.0
  %298 = vmatpush1.msra.mxu0 0.0
  %299 = vmatprep.subr.mxu0 0.0
  %300 = vmatpush1.msra.mxu0 0.0
  %301 = vmatprep.subr.mxu0 0.0
  %302 = vmatpush1.msra.mxu0 0.0
  %303 = vmatprep.subr.mxu0 0.0
  %304 = vmatpush1.msra.mxu0 0.0
  %305 = vmatprep.subr.mxu0 0.0
  %306 = vmatpush1.msra.mxu0 0.0
  %307 = vmatprep.subr.mxu0 0.0
  %308 = vmatpush1.msra.mxu0 0.0
  %309 = vmatprep.subr.mxu0 0.0
  %310 = vmatpush1.msra.mxu0 0.0
  %311 = vmatprep.subr.mxu0 0.0
  %312 = vmatpush1.msra.mxu0 0.0
  %313 = vmatprep.subr.mxu0 0.0
  %314 = vmatpush1.msra.mxu0 0.0
  %315 = vmatprep.subr.mxu0 0.0
  %316 = vmatpush1.msra.mxu0 0.0
  %317 = vmatprep.subr.mxu0 0.0
  %318 = vmatpush1.msra.mxu0 0.0
  %319 = vmatprep.subr.mxu0 0.0
  %320 = vmatpush1.msra.mxu0 0.0
  %321 = vmatprep.subr.mxu0 0.0
  %322 = vmatpush1.msra.mxu0 0.0
  %323 = vmatprep.subr.mxu0 0.0
  %324 = vmatpush1.msra.mxu0 0.0
  %325 = vmatprep.mubr.f32.mxu0 0.0
  %v326 = vand.u32 %v32, 4294901760
  %v327 = vsub.f32 %v32, %v326
  %v328 = vand.u32 %v327, 4294901760
  %329 = vmatmul.mubr.f32.gmra.mrb[0].mxu0 %v328
  %v330 = vpop.f32.mrb[0].mxu0
  %v331 = vadd.f32 %v257, %v330
  %v332 = vpop.f32.mrb[0].mxu0
  %333 = vdwg.mxu0
  %334 = vmatprep.subr.mxu0 0.0
  %v335 = vand.u32 %v24, 4294901760
  %v336 = vsub.f32 %v24, %v335
  %v337 = vand.u32 %v336, 4294901760
  %338 = vmatpush1.msra.mxu0 %v337
  %339 = vmatprep.subr.mxu0 0.0
  %340 = vmatpush1.msra.mxu0 0.0
  %341 = vmatprep.subr.mxu0 0.0
  %342 = vmatpush1.msra.mxu0 0.0
  %343 = vmatprep.subr.mxu0 0.0
  %344 = vmatpush1.msra.mxu0 0.0
  %345 = vmatprep.subr.mxu0 0.0
  %346 = vmatpush1.msra.mxu0 0.0
  %347 = vmatprep.subr.mxu0 0.0
  %348 = vmatpush1.msra.mxu0 0.0
  %349 = vmatprep.subr.mxu0 0.0
  %350 = vmatpush1.msra.mxu0 0.0
  %351 = vmatprep.subr.mxu0 0.0
  %352 = vmatpush1.msra.mxu0 0.0
  %353 = vmatprep.subr.mxu0 0.0
  %354 = vmatpush1.msra.mxu0 0.0
  %355 = vmatprep.subr.mxu0 0.0
  %356 = vmatpush1.msra.mxu0 0.0
  %357 = vmatprep.subr.mxu0 0.0
  %358 = vmatpush1.msra.mxu0 0.0
  %359 = vmatprep.subr.mxu0 0.0
  %360 = vmatpush1.msra.mxu0 0.0
  %361 = vmatprep.subr.mxu0 0.0
  %362 = vmatpush1.msra.mxu0 0.0
  %363 = vmatprep.subr.mxu0 0.0
  %364 = vmatpush1.msra.mxu0 0.0
  %365 = vmatprep.subr.mxu0 0.0
  %366 = vmatpush1.msra.mxu0 0.0
  %367 = vmatprep.subr.mxu0 0.0
  %368 = vmatpush1.msra.mxu0 0.0
  %369 = vmatprep.subr.mxu0 0.0
  %370 = vmatpush1.msra.mxu0 0.0
  %371 = vmatprep.subr.mxu0 0.0
  %372 = vmatpush1.msra.mxu0 0.0
  %373 = vmatprep.subr.mxu0 0.0
  %374 = vmatpush1.msra.mxu0 0.0
  %375 = vmatprep.subr.mxu0 0.0
  %376 = vmatpush1.msra.mxu0 0.0
  %377 = vmatprep.subr.mxu0 0.0
  %378 = vmatpush1.msra.mxu0 0.0
  %379 = vmatprep.subr.mxu0 0.0
  %380 = vmatpush1.msra.mxu0 0.0
  %381 = vmatprep.subr.mxu0 0.0
  %382 = vmatpush1.msra.mxu0 0.0
  %383 = vmatprep.subr.mxu0 0.0
  %384 = vmatpush1.msra.mxu0 0.0
  %385 = vmatprep.subr.mxu0 0.0
  %386 = vmatpush1.msra.mxu0 0.0
  %387 = vmatprep.subr.mxu0 0.0
  %388 = vmatpush1.msra.mxu0 0.0
  %389 = vmatprep.subr.mxu0 0.0
  %390 = vmatpush1.msra.mxu0 0.0
  %391 = vmatprep.subr.mxu0 0.0
  %392 = vmatpush1.msra.mxu0 0.0
  %393 = vmatprep.subr.mxu0 0.0
  %394 = vmatpush1.msra.mxu0 0.0
  %395 = vmatprep.subr.mxu0 0.0
  %396 = vmatpush1.msra.mxu0 0.0
  %397 = vmatprep.subr.mxu0 0.0
  %398 = vmatpush1.msra.mxu0 0.0
  %399 = vmatprep.subr.mxu0 0.0
  %400 = vmatpush1.msra.mxu0 0.0
  %401 = vmatprep.mubr.f32.mxu0 0.0
  %v402 = vand.u32 %v32, 4294901760
  %403 = vmatmul.mubr.f32.gmra.mrb[0].mxu0 %v402
  %v404 = vpop.f32.mrb[0].mxu0
  %v405 = vadd.f32 %v331, %v404
  %v406 = vpop.f32.mrb[0].mxu0
  %407 = vdwg.mxu0
  %408 = vmatprep.subr.mxu0 0.0
  %v409 = vand.u32 %v24, 4294901760
  %410 = vmatpush1.msra.mxu0 %v409
  %411 = vmatprep.subr.mxu0 0.0
  %412 = vmatpush1.msra.mxu0 0.0
  %413 = vmatprep.subr.mxu0 0.0
  %414 = vmatpush1.msra.mxu0 0.0
  %415 = vmatprep.subr.mxu0 0.0
  %416 = vmatpush1.msra.mxu0 0.0
  %417 = vmatprep.subr.mxu0 0.0
  %418 = vmatpush1.msra.mxu0 0.0
  %419 = vmatprep.subr.mxu0 0.0
  %420 = vmatpush1.msra.mxu0 0.0
  %421 = vmatprep.subr.mxu0 0.0
  %422 = vmatpush1.msra.mxu0 0.0
  %423 = vmatprep.subr.mxu0 0.0
  %424 = vmatpush1.msra.mxu0 0.0
  %425 = vmatprep.subr.mxu0 0.0
  %426 = vmatpush1.msra.mxu0 0.0
  %427 = vmatprep.subr.mxu0 0.0
  %428 = vmatpush1.msra.mxu0 0.0
  %429 = vmatprep.subr.mxu0 0.0
  %430 = vmatpush1.msra.mxu0 0.0
  %431 = vmatprep.subr.mxu0 0.0
  %432 = vmatpush1.msra.mxu0 0.0
  %433 = vmatprep.subr.mxu0 0.0
  %434 = vmatpush1.msra.mxu0 0.0
  %435 = vmatprep.subr.mxu0 0.0
  %436 = vmatpush1.msra.mxu0 0.0
  %437 = vmatprep.subr.mxu0 0.0
  %438 = vmatpush1.msra.mxu0 0.0
  %439 = vmatprep.subr.mxu0 0.0
  %440 = vmatpush1.msra.mxu0 0.0
  %441 = vmatprep.subr.mxu0 0.0
  %442 = vmatpush1.msra.mxu0 0.0
  %443 = vmatprep.subr.mxu0 0.0
  %444 = vmatpush1.msra.mxu0 0.0
  %445 = vmatprep.subr.mxu0 0.0
  %446 = vmatpush1.msra.mxu0 0.0
  %447 = vmatprep.subr.mxu0 0.0
  %448 = vmatpush1.msra.mxu0 0.0
  %449 = vmatprep.subr.mxu0 0.0
  %450 = vmatpush1.msra.mxu0 0.0
  %451 = vmatprep.subr.mxu0 0.0
  %452 = vmatpush1.msra.mxu0 0.0
  %453 = vmatprep.subr.mxu0 0.0
  %454 = vmatpush1.msra.mxu0 0.0
  %455 = vmatprep.subr.mxu0 0.0
  %456 = vmatpush1.msra.mxu0 0.0
  %457 = vmatprep.subr.mxu0 0.0
  %458 = vmatpush1.msra.mxu0 0.0
  %459 = vmatprep.subr.mxu0 0.0
  %460 = vmatpush1.msra.mxu0 0.0
  %461 = vmatprep.subr.mxu0 0.0
  %462 = vmatpush1.msra.mxu0 0.0
  %463 = vmatprep.subr.mxu0 0.0
  %464 = vmatpush1.msra.mxu0 0.0
  %465 = vmatprep.subr.mxu0 0.0
  %466 = vmatpush1.msra.mxu0 0.0
  %467 = vmatprep.subr.mxu0 0.0
  %468 = vmatpush1.msra.mxu0 0.0
  %469 = vmatprep.subr.mxu0 0.0
  %470 = vmatpush1.msra.mxu0 0.0
  %471 = vmatprep.subr.mxu0 0.0
  %472 = vmatpush1.msra.mxu0 0.0
  %473 = vmatprep.mubr.f32.mxu0 0.0
  %v474 = vand.u32 %v32, 4294901760
  %475 = vmatmul.mubr.f32.gmra.mrb[0].mxu0 %v474
  %v476 = vpop.f32.mrb[0].mxu0
  %v477 = vadd.f32 %v405, %v476
  %v478 = vpop.f32.mrb[0].mxu0
  %479 = vdwg.mxu0
  %v480 = vmax.f32 %v477, 0.0
  %v481 = vld [vmem:[%s2] sm:$0xff]
  %v482 = vld [vmem:[%s2 + $0x8] sm:$0xff]
  %v483 = vld [vmem:[%s2 + $0x10] sm:$0xff]
  %v484 = vld [vmem:[%s2 + $0x18] sm:$0xff]
  %v485 = vld [vmem:[%s2 + $0x20] sm:$0xff]
  %v486 = vld [vmem:[%s2 + $0x28] sm:$0xff]
  %v487 = vld [vmem:[%s2 + $0x30] sm:$0xff]
  %v488 = vld [vmem:[%s2 + $0x38] sm:$0xff]
  %v489 = vld [vmem:[%s5 + $0x1] sm:$0x1]
  %v490 = vlaneseq
  %v491 = vshrl.u32 %v490, 7
  %v492 = vsub.s32 0, %v491
  %v493 = vrot.slane %v489, %v492
  %vm494 = vcmask 523264
  %v496 = vsel %vm494, %v480, 0
  %498 = vmatprep.subr.mxu0 0.0
  %v499 = vand.u32 %v481, 4294901760
  %500 = vmatpush1.msra.mxu0 %v499
  %501 = vmatprep.subr.mxu0 0.0
  %v502 = vand.u32 %v482, 4294901760
  %503 = vmatpush1.msra.mxu0 %v502
  %504 = vmatprep.subr.mxu0 0.0
  %v505 = vand.u32 %v483, 4294901760
  %506 = vmatpush1.msra.mxu0 %v505
  %507 = vmatprep.subr.mxu0 0.0
  %v508 = vand.u32 %v484, 4294901760
  %509 = vmatpush1.msra.mxu0 %v508
  %510 = vmatprep.subr.mxu0 0.0
  %v511 = vand.u32 %v485, 4294901760
  %512 = vmatpush1.msra.mxu0 %v511
  %513 = vmatprep.subr.mxu0 0.0
  %v514 = vand.u32 %v486, 4294901760
  %515 = vmatpush1.msra.mxu0 %v514
  %516 = vmatprep.subr.mxu0 0.0
  %v517 = vand.u32 %v487, 4294901760
  %518 = vmatpush1.msra.mxu0 %v517
  %519 = vmatprep.subr.mxu0 0.0
  %v520 = vand.u32 %v488, 4294901760
  %521 = vmatpush1.msra.mxu0 %v520
  %522 = vmatprep.subr.mxu0 0.0
  %523 = vmatpush1.msra.mxu0 0.0
  %524 = vmatprep.subr.mxu0 0.0
  %525 = vmatpush1.msra.mxu0 0.0
  %526 = vmatprep.subr.mxu0 0.0
  %527 = vmatpush1.msra.mxu0 0.0
  %528 = vmatprep.subr.mxu0 0.0
  %529 = vmatpush1.msra.mxu0 0.0
  %530 = vmatprep.subr.mxu0 0.0
  %531 = vmatpush1.msra.mxu0 0.0
  %532 = vmatprep.subr.mxu0 0.0
  %533 = vmatpush1.msra.mxu0 0.0
  %534 = vmatprep.subr.mxu0 0.0
  %535 = vmatpush1.msra.mxu0 0.0
  %536 = vmatprep.subr.mxu0 0.0
  %537 = vmatpush1.msra.mxu0 0.0
  %538 = vmatprep.subr.mxu0 0.0
  %539 = vmatpush1.msra.mxu0 0.0
  %540 = vmatprep.subr.mxu0 0.0
  %541 = vmatpush1.msra.mxu0 0.0
  %542 = vmatprep.subr.mxu0 0.0
  %543 = vmatpush1.msra.mxu0 0.0
  %544 = vmatprep.subr.mxu0 0.0
  %545 = vmatpush1.msra.mxu0 0.0
  %546 = vmatprep.subr.mxu0 0.0
  %547 = vmatpush1.msra.mxu0 0.0
  %548 = vmatprep.subr.mxu0 0.0
  %549 = vmatpush1.msra.mxu0 0.0
  %550 = vmatprep.subr.mxu0 0.0
  %551 = vmatpush1.msra.mxu0 0.0
  %552 = vmatprep.subr.mxu0 0.0
  %553 = vmatpush1.msra.mxu0 0.0
  %554 = vmatprep.subr.mxu0 0.0
  %555 = vmatpush1.msra.mxu0 0.0
  %556 = vmatprep.subr.mxu0 0.0
  %557 = vmatpush1.msra.mxu0 0.0
  %558 = vmatprep.subr.mxu0 0.0
  %559 = vmatpush1.msra.mxu0 0.0
  %560 = vmatprep.subr.mxu0 0.0
  %561 = vmatpush1.msra.mxu0 0.0
  %562 = vmatprep.subr.mxu0 0.0
  %563 = vmatpush1.msra.mxu0 0.0
  %564 = vmatprep.subr.mxu0 0.0
  %565 = vmatpush1.msra.mxu0 0.0
  %566 = vmatprep.subr.mxu0 0.0
  %567 = vmatpush1.msra.mxu0 0.0
  %568 = vmatprep.subr.mxu0 0.0
  %569 = vmatpush1.msra.mxu0 0.0
  %570 = vmatprep.mubr.f32.mxu0 0.0
  %v571 = vand.u32 %v496, 4294901760
  %v572 = vsub.f32 %v496, %v571
  %v573 = vand.u32 %v572, 4294901760
  %v574 = vsub.f32 %v572, %v573
  %v575 = vand.u32 %v574, 4294901760
  %576 = vmatmul.mubr.f32.gmra.mrb[0].mxu0 %v575
  %v577 = vpop.f32.mrb[0].mxu0
  %v578 = vadd.f32 %v493, %v577
  %v579 = vpop.f32.mrb[0].mxu0
  %580 = vdwg.mxu0
  %581 = vmatprep.subr.mxu0 0.0
  %v582 = vand.u32 %v481, 4294901760
  %v583 = vsub.f32 %v481, %v582
  %v584 = vand.u32 %v583, 4294901760
  %v585 = vsub.f32 %v583, %v584
  %v586 = vand.u32 %v585, 4294901760
  %587 = vmatpush1.msra.mxu0 %v586
  %588 = vmatprep.subr.mxu0 0.0
  %v589 = vand.u32 %v482, 4294901760
  %v590 = vsub.f32 %v482, %v589
  %v591 = vand.u32 %v590, 4294901760
  %v592 = vsub.f32 %v590, %v591
  %v593 = vand.u32 %v592, 4294901760
  %594 = vmatpush1.msra.mxu0 %v593
  %595 = vmatprep.subr.mxu0 0.0
  %v596 = vand.u32 %v483, 4294901760
  %v597 = vsub.f32 %v483, %v596
  %v598 = vand.u32 %v597, 4294901760
  %v599 = vsub.f32 %v597, %v598
  %v600 = vand.u32 %v599, 4294901760
  %601 = vmatpush1.msra.mxu0 %v600
  %602 = vmatprep.subr.mxu0 0.0
  %v603 = vand.u32 %v484, 4294901760
  %v604 = vsub.f32 %v484, %v603
  %v605 = vand.u32 %v604, 4294901760
  %v606 = vsub.f32 %v604, %v605
  %v607 = vand.u32 %v606, 4294901760
  %608 = vmatpush1.msra.mxu0 %v607
  %609 = vmatprep.subr.mxu0 0.0
  %v610 = vand.u32 %v485, 4294901760
  %v611 = vsub.f32 %v485, %v610
  %v612 = vand.u32 %v611, 4294901760
  %v613 = vsub.f32 %v611, %v612
  %v614 = vand.u32 %v613, 4294901760
  %615 = vmatpush1.msra.mxu0 %v614
  %616 = vmatprep.subr.mxu0 0.0
  %v617 = vand.u32 %v486, 4294901760
  %v618 = vsub.f32 %v486, %v617
  %v619 = vand.u32 %v618, 4294901760
  %v620 = vsub.f32 %v618, %v619
  %v621 = vand.u32 %v620, 4294901760
  %622 = vmatpush1.msra.mxu0 %v621
  %623 = vmatprep.subr.mxu0 0.0
  %v624 = vand.u32 %v487, 4294901760
  %v625 = vsub.f32 %v487, %v624
  %v626 = vand.u32 %v625, 4294901760
  %v627 = vsub.f32 %v625, %v626
  %v628 = vand.u32 %v627, 4294901760
  %629 = vmatpush1.msra.mxu0 %v628
  %630 = vmatprep.subr.mxu0 0.0
  %v631 = vand.u32 %v488, 4294901760
  %v632 = vsub.f32 %v488, %v631
  %v633 = vand.u32 %v632, 4294901760
  %v634 = vsub.f32 %v632, %v633
  %v635 = vand.u32 %v634, 4294901760
  %636 = vmatpush1.msra.mxu0 %v635
  %637 = vmatprep.subr.mxu0 0.0
  %638 = vmatpush1.msra.mxu0 0.0
  %639 = vmatprep.subr.mxu0 0.0
  %640 = vmatpush1.msra.mxu0 0.0
  %641 = vmatprep.subr.mxu0 0.0
  %642 = vmatpush1.msra.mxu0 0.0
  %643 = vmatprep.subr.mxu0 0.0
  %644 = vmatpush1.msra.mxu0 0.0
  %645 = vmatprep.subr.mxu0 0.0
  %646 = vmatpush1.msra.mxu0 0.0
  %647 = vmatprep.subr.mxu0 0.0
  %648 = vmatpush1.msra.mxu0 0.0
  %649 = vmatprep.subr.mxu0 0.0
  %650 = vmatpush1.msra.mxu0 0.0
  %651 = vmatprep.subr.mxu0 0.0
  %652 = vmatpush1.msra.mxu0 0.0
  %653 = vmatprep.subr.mxu0 0.0
  %654 = vmatpush1.msra.mxu0 0.0
  %655 = vmatprep.subr.mxu0 0.0
  %656 = vmatpush1.msra.mxu0 0.0
  %657 = vmatprep.subr.mxu0 0.0
  %658 = vmatpush1.msra.mxu0 0.0
  %659 = vmatprep.subr.mxu0 0.0
  %660 = vmatpush1.msra.mxu0 0.0
  %661 = vmatprep.subr.mxu0 0.0
  %662 = vmatpush1.msra.mxu0 0.0
  %663 = vmatprep.subr.mxu0 0.0
  %664 = vmatpush1.msra.mxu0 0.0
  %665 = vmatprep.subr.mxu0 0.0
  %666 = vmatpush1.msra.mxu0 0.0
  %667 = vmatprep.subr.mxu0 0.0
  %668 = vmatpush1.msra.mxu0 0.0
  %669 = vmatprep.subr.mxu0 0.0
  %670 = vmatpush1.msra.mxu0 0.0
  %671 = vmatprep.subr.mxu0 0.0
  %672 = vmatpush1.msra.mxu0 0.0
  %673 = vmatprep.subr.mxu0 0.0
  %674 = vmatpush1.msra.mxu0 0.0
  %675 = vmatprep.subr.mxu0 0.0
  %676 = vmatpush1.msra.mxu0 0.0
  %677 = vmatprep.subr.mxu0 0.0
  %678 = vmatpush1.msra.mxu0 0.0
  %679 = vmatprep.subr.mxu0 0.0
  %680 = vmatpush1.msra.mxu0 0.0
  %681 = vmatprep.subr.mxu0 0.0
  %682 = vmatpush1.msra.mxu0 0.0
  %683 = vmatprep.subr.mxu0 0.0
  %684 = vmatpush1.msra.mxu0 0.0
  %685 = vmatprep.mubr.f32.mxu0 0.0
  %v686 = vand.u32 %v496, 4294901760
  %687 = vmatmul.mubr.f32.gmra.mrb[0].mxu0 %v686
  %v688 = vpop.f32.mrb[0].mxu0
  %v689 = vadd.f32 %v578, %v688
  %v690 = vpop.f32.mrb[0].mxu0
  %691 = vdwg.mxu0
  %692 = vmatprep.subr.mxu0 0.0
  %v693 = vand.u32 %v481, 4294901760
  %v694 = vsub.f32 %v481, %v693
  %695 = vmatpush1.msra.mxu0 %v694
  %696 = vmatprep.subr.mxu0 0.0
  %v697 = vand.u32 %v482, 4294901760
  %v698 = vsub.f32 %v482, %v697
  %699 = vmatpush1.msra.mxu0 %v698
  %700 = vmatprep.subr.mxu0 0.0
  %v701 = vand.u32 %v483, 4294901760
  %v702 = vsub.f32 %v483, %v701
  %703 = vmatpush1.msra.mxu0 %v702
  %704 = vmatprep.subr.mxu0 0.0
  %v705 = vand.u32 %v484, 4294901760
  %v706 = vsub.f32 %v484, %v705
  %707 = vmatpush1.msra.mxu0 %v706
  %708 = vmatprep.subr.mxu0 0.0
  %v709 = vand.u32 %v485, 4294901760
  %v710 = vsub.f32 %v485, %v709
  %711 = vmatpush1.msra.mxu0 %v710
  %712 = vmatprep.subr.mxu0 0.0
  %v713 = vand.u32 %v486, 4294901760
  %v714 = vsub.f32 %v486, %v713
  %715 = vmatpush1.msra.mxu0 %v714
  %716 = vmatprep.subr.mxu0 0.0
  %v717 = vand.u32 %v487, 4294901760
  %v718 = vsub.f32 %v487, %v717
  %719 = vmatpush1.msra.mxu0 %v718
  %720 = vmatprep.subr.mxu0 0.0
  %v721 = vand.u32 %v488, 4294901760
  %v722 = vsub.f32 %v488, %v721
  %723 = vmatpush1.msra.mxu0 %v722
  %724 = vmatprep.subr.mxu0 0.0
  %725 = vmatpush1.msra.mxu0 0.0
  %726 = vmatprep.subr.mxu0 0.0
  %727 = vmatpush1.msra.mxu0 0.0
  %728 = vmatprep.subr.mxu0 0.0
  %729 = vmatpush1.msra.mxu0 0.0
  %730 = vmatprep.subr.mxu0 0.0
  %731 = vmatpush1.msra.mxu0 0.0
  %732 = vmatprep.subr.mxu0 0.0
  %733 = vmatpush1.msra.mxu0 0.0
  %734 = vmatprep.subr.mxu0 0.0
  %735 = vmatpush1.msra.mxu0 0.0
  %736 = vmatprep.subr.mxu0 0.0
  %737 = vmatpush1.msra.mxu0 0.0
  %738 = vmatprep.subr.mxu0 0.0
  %739 = vmatpush1.msra.mxu0 0.0
  %740 = vmatprep.subr.mxu0 0.0
  %741 = vmatpush1.msra.mxu0 0.0
  %742 = vmatprep.subr.mxu0 0.0
  %743 = vmatpush1.msra.mxu0 0.0
  %744 = vmatprep.subr.mxu0 0.0
  %745 = vmatpush1.msra.mxu0 0.0
  %746 = vmatprep.subr.mxu0 0.0
  %747 = vmatpush1.msra.mxu0 0.0
  %748 = vmatprep.subr.mxu0 0.0
  %749 = vmatpush1.msra.mxu0 0.0
  %750 = vmatprep.subr.mxu0 0.0
  %751 = vmatpush1.msra.mxu0 0.0
  %752 = vmatprep.subr.mxu0 0.0
  %753 = vmatpush1.msra.mxu0 0.0
  %754 = vmatprep.subr.mxu0 0.0
  %755 = vmatpush1.msra.mxu0 0.0
  %756 = vmatprep.subr.mxu0 0.0
  %757 = vmatpush1.msra.mxu0 0.0
  %758 = vmatprep.subr.mxu0 0.0
  %759 = vmatpush1.msra.mxu0 0.0
  %760 = vmatprep.subr.mxu0 0.0
  %761 = vmatpush1.msra.mxu0 0.0
  %762 = vmatprep.subr.mxu0 0.0
  %763 = vmatpush1.msra.mxu0 0.0
  %764 = vmatprep.subr.mxu0 0.0
  %765 = vmatpush1.msra.mxu0 0.0
  %766 = vmatprep.subr.mxu0 0.0
  %767 = vmatpush1.msra.mxu0 0.0
  %768 = vmatprep.subr.mxu0 0.0
  %769 = vmatpush1.msra.mxu0 0.0
  %770 = vmatprep.subr.mxu0 0.0
  %771 = vmatpush1.msra.mxu0 0.0
  %772 = vmatprep.mubr.f32.mxu0 0.0
  %v773 = vand.u32 %v496, 4294901760
  %v774 = vsub.f32 %v496, %v773
  %775 = vmatmul.mubr.f32.gmra.mrb[0].mxu0 %v774
  %v776 = vpop.f32.mrb[0].mxu0
  %v777 = vadd.f32 %v689, %v776
  %v778 = vpop.f32.mrb[0].mxu0
  %779 = vdwg.mxu0
  %780 = vmatprep.subr.mxu0 0.0
  %v781 = vand.u32 %v481, 4294901760
  %782 = vmatpush1.msra.mxu0 %v781
  %783 = vmatprep.subr.mxu0 0.0
  %v784 = vand.u32 %v482, 4294901760
  %785 = vmatpush1.msra.mxu0 %v784
  %786 = vmatprep.subr.mxu0 0.0
  %v787 = vand.u32 %v483, 4294901760
  %788 = vmatpush1.msra.mxu0 %v787
  %789 = vmatprep.subr.mxu0 0.0
  %v790 = vand.u32 %v484, 4294901760
  %791 = vmatpush1.msra.mxu0 %v790
  %792 = vmatprep.subr.mxu0 0.0
  %v793 = vand.u32 %v485, 4294901760
  %794 = vmatpush1.msra.mxu0 %v793
  %795 = vmatprep.subr.mxu0 0.0
  %v796 = vand.u32 %v486, 4294901760
  %797 = vmatpush1.msra.mxu0 %v796
  %798 = vmatprep.subr.mxu0 0.0
  %v799 = vand.u32 %v487, 4294901760
  %800 = vmatpush1.msra.mxu0 %v799
  %801 = vmatprep.subr.mxu0 0.0
  %v802 = vand.u32 %v488, 4294901760
  %803 = vmatpush1.msra.mxu0 %v802
  %804 = vmatprep.subr.mxu0 0.0
  %805 = vmatpush1.msra.mxu0 0.0
  %806 = vmatprep.subr.mxu0 0.0
  %807 = vmatpush1.msra.mxu0 0.0
  %808 = vmatprep.subr.mxu0 0.0
  %809 = vmatpush1.msra.mxu0 0.0
  %810 = vmatprep.subr.mxu0 0.0
  %811 = vmatpush1.msra.mxu0 0.0
  %812 = vmatprep.subr.mxu0 0.0
  %813 = vmatpush1.msra.mxu0 0.0
  %814 = vmatprep.subr.mxu0 0.0
  %815 = vmatpush1.msra.mxu0 0.0
  %816 = vmatprep.subr.mxu0 0.0
  %817 = vmatpush1.msra.mxu0 0.0
  %818 = vmatprep.subr.mxu0 0.0
  %819 = vmatpush1.msra.mxu0 0.0
  %820 = vmatprep.subr.mxu0 0.0
  %821 = vmatpush1.msra.mxu0 0.0
  %822 = vmatprep.subr.mxu0 0.0
  %823 = vmatpush1.msra.mxu0 0.0
  %824 = vmatprep.subr.mxu0 0.0
  %825 = vmatpush1.msra.mxu0 0.0
  %826 = vmatprep.subr.mxu0 0.0
  %827 = vmatpush1.msra.mxu0 0.0
  %828 = vmatprep.subr.mxu0 0.0
  %829 = vmatpush1.msra.mxu0 0.0
  %830 = vmatprep.subr.mxu0 0.0
  %831 = vmatpush1.msra.mxu0 0.0
  %832 = vmatprep.subr.mxu0 0.0
  %833 = vmatpush1.msra.mxu0 0.0
  %834 = vmatprep.subr.mxu0 0.0
  %835 = vmatpush1.msra.mxu0 0.0
  %836 = vmatprep.subr.mxu0 0.0
  %837 = vmatpush1.msra.mxu0 0.0
  %838 = vmatprep.subr.mxu0 0.0
  %839 = vmatpush1.msra.mxu0 0.0
  %840 = vmatprep.subr.mxu0 0.0
  %841 = vmatpush1.msra.mxu0 0.0
  %842 = vmatprep.subr.mxu0 0.0
  %843 = vmatpush1.msra.mxu0 0.0
  %844 = vmatprep.subr.mxu0 0.0
  %845 = vmatpush1.msra.mxu0 0.0
  %846 = vmatprep.subr.mxu0 0.0
  %847 = vmatpush1.msra.mxu0 0.0
  %848 = vmatprep.subr.mxu0 0.0
  %849 = vmatpush1.msra.mxu0 0.0
  %850 = vmatprep.subr.mxu0 0.0
  %851 = vmatpush1.msra.mxu0 0.0
  %852 = vmatprep.mubr.f32.mxu0 0.0
  %v853 = vand.u32 %v496, 4294901760
  %v854 = vsub.f32 %v496, %v853
  %v855 = vand.u32 %v854, 4294901760
  %856 = vmatmul.mubr.f32.gmra.mrb[0].mxu0 %v855
  %v857 = vpop.f32.mrb[0].mxu0
  %v858 = vadd.f32 %v777, %v857
  %v859 = vpop.f32.mrb[0].mxu0
  %860 = vdwg.mxu0
  %861 = vmatprep.subr.mxu0 0.0
  %v862 = vand.u32 %v481, 4294901760
  %v863 = vsub.f32 %v481, %v862
  %v864 = vand.u32 %v863, 4294901760
  %865 = vmatpush1.msra.mxu0 %v864
  %866 = vmatprep.subr.mxu0 0.0
  %v867 = vand.u32 %v482, 4294901760
  %v868 = vsub.f32 %v482, %v867
  %v869 = vand.u32 %v868, 4294901760
  %870 = vmatpush1.msra.mxu0 %v869
  %871 = vmatprep.subr.mxu0 0.0
  %v872 = vand.u32 %v483, 4294901760
  %v873 = vsub.f32 %v483, %v872
  %v874 = vand.u32 %v873, 4294901760
  %875 = vmatpush1.msra.mxu0 %v874
  %876 = vmatprep.subr.mxu0 0.0
  %v877 = vand.u32 %v484, 4294901760
  %v878 = vsub.f32 %v484, %v877
  %v879 = vand.u32 %v878, 4294901760
  %880 = vmatpush1.msra.mxu0 %v879
  %881 = vmatprep.subr.mxu0 0.0
  %v882 = vand.u32 %v485, 4294901760
  %v883 = vsub.f32 %v485, %v882
  %v884 = vand.u32 %v883, 4294901760
  %885 = vmatpush1.msra.mxu0 %v884
  %886 = vmatprep.subr.mxu0 0.0
  %v887 = vand.u32 %v486, 4294901760
  %v888 = vsub.f32 %v486, %v887
  %v889 = vand.u32 %v888, 4294901760
  %890 = vmatpush1.msra.mxu0 %v889
  %891 = vmatprep.subr.mxu0 0.0
  %v892 = vand.u32 %v487, 4294901760
  %v893 = vsub.f32 %v487, %v892
  %v894 = vand.u32 %v893, 4294901760
  %895 = vmatpush1.msra.mxu0 %v894
  %896 = vmatprep.subr.mxu0 0.0
  %v897 = vand.u32 %v488, 4294901760
  %v898 = vsub.f32 %v488, %v897
  %v899 = vand.u32 %v898, 4294901760
  %900 = vmatpush1.msra.mxu0 %v899
  %901 = vmatprep.subr.mxu0 0.0
  %902 = vmatpush1.msra.mxu0 0.0
  %903 = vmatprep.subr.mxu0 0.0
  %904 = vmatpush1.msra.mxu0 0.0
  %905 = vmatprep.subr.mxu0 0.0
  %906 = vmatpush1.msra.mxu0 0.0
  %907 = vmatprep.subr.mxu0 0.0
  %908 = vmatpush1.msra.mxu0 0.0
  %909 = vmatprep.subr.mxu0 0.0
  %910 = vmatpush1.msra.mxu0 0.0
  %911 = vmatprep.subr.mxu0 0.0
  %912 = vmatpush1.msra.mxu0 0.0
  %913 = vmatprep.subr.mxu0 0.0
  %914 = vmatpush1.msra.mxu0 0.0
  %915 = vmatprep.subr.mxu0 0.0
  %916 = vmatpush1.msra.mxu0 0.0
  %917 = vmatprep.subr.mxu0 0.0
  %918 = vmatpush1.msra.mxu0 0.0
  %919 = vmatprep.subr.mxu0 0.0
  %920 = vmatpush1.msra.mxu0 0.0
  %921 = vmatprep.subr.mxu0 0.0
  %922 = vmatpush1.msra.mxu0 0.0
  %923 = vmatprep.subr.mxu0 0.0
  %924 = vmatpush1.msra.mxu0 0.0
  %925 = vmatprep.subr.mxu0 0.0
  %926 = vmatpush1.msra.mxu0 0.0
  %927 = vmatprep.subr.mxu0 0.0
  %928 = vmatpush1.msra.mxu0 0.0
  %929 = vmatprep.subr.mxu0 0.0
  %930 = vmatpush1.msra.mxu0 0.0
  %931 = vmatprep.subr.mxu0 0.0
  %932 = vmatpush1.msra.mxu0 0.0
  %933 = vmatprep.subr.mxu0 0.0
  %934 = vmatpush1.msra.mxu0 0.0
  %935 = vmatprep.subr.mxu0 0.0
  %936 = vmatpush1.msra.mxu0 0.0
  %937 = vmatprep.subr.mxu0 0.0
  %938 = vmatpush1.msra.mxu0 0.0
  %939 = vmatprep.subr.mxu0 0.0
  %940 = vmatpush1.msra.mxu0 0.0
  %941 = vmatprep.subr.mxu0 0.0
  %942 = vmatpush1.msra.mxu0 0.0
  %943 = vmatprep.subr.mxu0 0.0
  %944 = vmatpush1.msra.mxu0 0.0
  %945 = vmatprep.subr.mxu0 0.0
  %946 = vmatpush1.msra.mxu0 0.0
  %947 = vmatprep.subr.mxu0 0.0
  %948 = vmatpush1.msra.mxu0 0.0
  %949 = vmatprep.mubr.f32.mxu0 0.0
  %v950 = vand.u32 %v496, 4294901760
  %951 = vmatmul.mubr.f32.gmra.mrb[0].mxu0 %v950
  %v952 = vpop.f32.mrb[0].mxu0
  %v953 = vadd.f32 %v858, %v952
  %v954 = vpop.f32.mrb[0].mxu0
  %955 = vdwg.mxu0
  %956 = vmatprep.subr.mxu0 0.0
  %v957 = vand.u32 %v481, 4294901760
  %958 = vmatpush1.msra.mxu0 %v957
  %959 = vmatprep.subr.mxu0 0.0
  %v960 = vand.u32 %v482, 4294901760
  %961 = vmatpush1.msra.mxu0 %v960
  %962 = vmatprep.subr.mxu0 0.0
  %v963 = vand.u32 %v483, 4294901760
  %964 = vmatpush1.msra.mxu0 %v963
  %965 = vmatprep.subr.mxu0 0.0
  %v966 = vand.u32 %v484, 4294901760
  %967 = vmatpush1.msra.mxu0 %v966
  %968 = vmatprep.subr.mxu0 0.0
  %v969 = vand.u32 %v485, 4294901760
  %970 = vmatpush1.msra.mxu0 %v969
  %971 = vmatprep.subr.mxu0 0.0
  %v972 = vand.u32 %v486, 4294901760
  %973 = vmatpush1.msra.mxu0 %v972
  %974 = vmatprep.subr.mxu0 0.0
  %v975 = vand.u32 %v487, 4294901760
  %976 = vmatpush1.msra.mxu0 %v975
  %977 = vmatprep.subr.mxu0 0.0
  %v978 = vand.u32 %v488, 4294901760
  %979 = vmatpush1.msra.mxu0 %v978
  %980 = vmatprep.subr.mxu0 0.0
  %981 = vmatpush1.msra.mxu0 0.0
  %982 = vmatprep.subr.mxu0 0.0
  %983 = vmatpush1.msra.mxu0 0.0
  %984 = vmatprep.subr.mxu0 0.0
  %985 = vmatpush1.msra.mxu0 0.0
  %986 = vmatprep.subr.mxu0 0.0
  %987 = vmatpush1.msra.mxu0 0.0
  %988 = vmatprep.subr.mxu0 0.0
  %989 = vmatpush1.msra.mxu0 0.0
  %990 = vmatprep.subr.mxu0 0.0
  %991 = vmatpush1.msra.mxu0 0.0
  %992 = vmatprep.subr.mxu0 0.0
  %993 = vmatpush1.msra.mxu0 0.0
  %994 = vmatprep.subr.mxu0 0.0
  %995 = vmatpush1.msra.mxu0 0.0
  %996 = vmatprep.subr.mxu0 0.0
  %997 = vmatpush1.msra.mxu0 0.0
  %998 = vmatprep.subr.mxu0 0.0
  %999 = vmatpush1.msra.mxu0 0.0
  %1000 = vmatprep.subr.mxu0 0.0
  %1001 = vmatpush1.msra.mxu0 0.0
  %1002 = vmatprep.subr.mxu0 0.0
  %1003 = vmatpush1.msra.mxu0 0.0
  %1004 = vmatprep.subr.mxu0 0.0
  %1005 = vmatpush1.msra.mxu0 0.0
  %1006 = vmatprep.subr.mxu0 0.0
  %1007 = vmatpush1.msra.mxu0 0.0
  %1008 = vmatprep.subr.mxu0 0.0
  %1009 = vmatpush1.msra.mxu0 0.0
  %1010 = vmatprep.subr.mxu0 0.0
  %1011 = vmatpush1.msra.mxu0 0.0
  %1012 = vmatprep.subr.mxu0 0.0
  %1013 = vmatpush1.msra.mxu0 0.0
  %1014 = vmatprep.subr.mxu0 0.0
  %1015 = vmatpush1.msra.mxu0 0.0
  %1016 = vmatprep.subr.mxu0 0.0
  %1017 = vmatpush1.msra.mxu0 0.0
  %1018 = vmatprep.subr.mxu0 0.0
  %1019 = vmatpush1.msra.mxu0 0.0
  %1020 = vmatprep.subr.mxu0 0.0
  %1021 = vmatpush1.msra.mxu0 0.0
  %1022 = vmatprep.subr.mxu0 0.0
  %1023 = vmatpush1.msra.mxu0 0.0
  %1024 = vmatprep.subr.mxu0 0.0
  %1025 = vmatpush1.msra.mxu0 0.0
  %1026 = vmatprep.subr.mxu0 0.0
  %1027 = vmatpush1.msra.mxu0 0.0
  %1028 = vmatprep.mubr.f32.mxu0 0.0
  %v1029 = vand.u32 %v496, 4294901760
  %1030 = vmatmul.mubr.f32.gmra.mrb[0].mxu0 %v1029
  %v1031 = vpop.f32.mrb[0].mxu0
  %v1032 = vadd.f32 %v953, %v1031
  %v1033 = vpop.f32.mrb[0].mxu0
  %1034 = vdwg.mxu0
  %v1035 = vmax.f32 %v1032, 0.0
  %v1036 = vld [vmem:[%s3] sm:$0xff]
  %v1037 = vld [vmem:[%s3 + $0x8] sm:$0xff]
  %v1038 = vld [vmem:[%s3 + $0x10] sm:$0xff]
  %v1039 = vld [vmem:[%s3 + $0x18] sm:$0xff]
  %v1040 = vld [vmem:[%s3 + $0x20] sm:$0xff]
  %v1041 = vld [vmem:[%s3 + $0x28] sm:$0xff]
  %v1042 = vld [vmem:[%s3 + $0x30] sm:$0xff]
  %v1043 = vld [vmem:[%s3 + $0x38] sm:$0xff]
  %v1044 = vld [vmem:[%s3 + $0x40] sm:$0xff]
  %v1045 = vld [vmem:[%s3 + $0x48] sm:$0xff]
  %v1046 = vld [vmem:[%s3 + $0x50] sm:$0xff]
  %v1047 = vld [vmem:[%s3 + $0x58] sm:$0xff]
  %v1048 = vld [vmem:[%s3 + $0x60] sm:$0xff]
  %v1049 = vld [vmem:[%s3 + $0x68] sm:$0xff]
  %v1050 = vld [vmem:[%s3 + $0x70] sm:$0xff]
  %v1051 = vld [vmem:[%s3 + $0x78] sm:$0xff]
  %v1052 = vld [vmem:[%s5 + $0x2] sm:$0x1]
  %v1053 = vlaneseq
  %v1054 = vshrl.u32 %v1053, 7
  %v1055 = vsub.s32 0, %v1054
  %v1056 = vrot.slane %v1052, %v1055
  %1057 = vmatprep.subr.mxu0 0.0
  %v1058 = vand.u32 %v1036, 4294901760
  %1059 = vmatpush1.msra.mxu0 %v1058
  %1060 = vmatprep.subr.mxu0 0.0
  %v1061 = vand.u32 %v1037, 4294901760
  %1062 = vmatpush1.msra.mxu0 %v1061
  %1063 = vmatprep.subr.mxu0 0.0
  %v1064 = vand.u32 %v1038, 4294901760
  %1065 = vmatpush1.msra.mxu0 %v1064
  %1066 = vmatprep.subr.mxu0 0.0
  %v1067 = vand.u32 %v1039, 4294901760
  %1068 = vmatpush1.msra.mxu0 %v1067
  %1069 = vmatprep.subr.mxu0 0.0
  %v1070 = vand.u32 %v1040, 4294901760
  %1071 = vmatpush1.msra.mxu0 %v1070
  %1072 = vmatprep.subr.mxu0 0.0
  %v1073 = vand.u32 %v1041, 4294901760
  %1074 = vmatpush1.msra.mxu0 %v1073
  %1075 = vmatprep.subr.mxu0 0.0
  %v1076 = vand.u32 %v1042, 4294901760
  %1077 = vmatpush1.msra.mxu0 %v1076
  %1078 = vmatprep.subr.mxu0 0.0
  %v1079 = vand.u32 %v1043, 4294901760
  %1080 = vmatpush1.msra.mxu0 %v1079
  %1081 = vmatprep.subr.mxu0 0.0
  %v1082 = vand.u32 %v1044, 4294901760
  %1083 = vmatpush1.msra.mxu0 %v1082
  %1084 = vmatprep.subr.mxu0 0.0
  %v1085 = vand.u32 %v1045, 4294901760
  %1086 = vmatpush1.msra.mxu0 %v1085
  %1087 = vmatprep.subr.mxu0 0.0
  %v1088 = vand.u32 %v1046, 4294901760
  %1089 = vmatpush1.msra.mxu0 %v1088
  %1090 = vmatprep.subr.mxu0 0.0
  %v1091 = vand.u32 %v1047, 4294901760
  %1092 = vmatpush1.msra.mxu0 %v1091
  %1093 = vmatprep.subr.mxu0 0.0
  %v1094 = vand.u32 %v1048, 4294901760
  %1095 = vmatpush1.msra.mxu0 %v1094
  %1096 = vmatprep.subr.mxu0 0.0
  %v1097 = vand.u32 %v1049, 4294901760
  %1098 = vmatpush1.msra.mxu0 %v1097
  %1099 = vmatprep.subr.mxu0 0.0
  %v1100 = vand.u32 %v1050, 4294901760
  %1101 = vmatpush1.msra.mxu0 %v1100
  %1102 = vmatprep.subr.mxu0 0.0
  %v1103 = vand.u32 %v1051, 4294901760
  %1104 = vmatpush1.msra.mxu0 %v1103
  %1105 = vmatprep.subr.mxu0 0.0
  %1106 = vmatpush1.msra.mxu0 0.0
  %1107 = vmatprep.subr.mxu0 0.0
  %1108 = vmatpush1.msra.mxu0 0.0
  %1109 = vmatprep.subr.mxu0 0.0
  %1110 = vmatpush1.msra.mxu0 0.0
  %1111 = vmatprep.subr.mxu0 0.0
  %1112 = vmatpush1.msra.mxu0 0.0
  %1113 = vmatprep.subr.mxu0 0.0
  %1114 = vmatpush1.msra.mxu0 0.0
  %1115 = vmatprep.subr.mxu0 0.0
  %1116 = vmatpush1.msra.mxu0 0.0
  %1117 = vmatprep.subr.mxu0 0.0
  %1118 = vmatpush1.msra.mxu0 0.0
  %1119 = vmatprep.subr.mxu0 0.0
  %1120 = vmatpush1.msra.mxu0 0.0
  %1121 = vmatprep.subr.mxu0 0.0
  %1122 = vmatpush1.msra.mxu0 0.0
  %1123 = vmatprep.subr.mxu0 0.0
  %1124 = vmatpush1.msra.mxu0 0.0
  %1125 = vmatprep.subr.mxu0 0.0
  %1126 = vmatpush1.msra.mxu0 0.0
  %1127 = vmatprep.subr.mxu0 0.0
  %1128 = vmatpush1.msra.mxu0 0.0
  %1129 = vmatprep.subr.mxu0 0.0
  %1130 = vmatpush1.msra.mxu0 0.0
  %1131 = vmatprep.subr.mxu0 0.0
  %1132 = vmatpush1.msra.mxu0 0.0
  %1133 = vmatprep.subr.mxu0 0.0
  %1134 = vmatpush1.msra.mxu0 0.0
  %1135 = vmatprep.subr.mxu0 0.0
  %1136 = vmatpush1.msra.mxu0 0.0
  %1137 = vmatprep.mubr.f32.mxu0 0.0
  %v1138 = vand.u32 %v1035, 4294901760
  %v1139 = vsub.f32 %v1035, %v1138
  %v1140 = vand.u32 %v1139, 4294901760
  %v1141 = vsub.f32 %v1139, %v1140
  %v1142 = vand.u32 %v1141, 4294901760
  %1143 = vmatmul.mubr.f32.gmra.mrb[0].mxu0 %v1142
  %v1144 = vpop.f32.mrb[0].mxu0
  %v1145 = vadd.f32 %v1056, %v1144
  %v1146 = vpop.f32.mrb[0].mxu0
  %1147 = vdwg.mxu0
  %1148 = vmatprep.subr.mxu0 0.0
  %v1149 = vand.u32 %v1036, 4294901760
  %v1150 = vsub.f32 %v1036, %v1149
  %v1151 = vand.u32 %v1150, 4294901760
  %v1152 = vsub.f32 %v1150, %v1151
  %v1153 = vand.u32 %v1152, 4294901760
  %1154 = vmatpush1.msra.mxu0 %v1153
  %1155 = vmatprep.subr.mxu0 0.0
  %v1156 = vand.u32 %v1037, 4294901760
  %v1157 = vsub.f32 %v1037, %v1156
  %v1158 = vand.u32 %v1157, 4294901760
  %v1159 = vsub.f32 %v1157, %v1158
  %v1160 = vand.u32 %v1159, 4294901760
  %1161 = vmatpush1.msra.mxu0 %v1160
  %1162 = vmatprep.subr.mxu0 0.0
  %v1163 = vand.u32 %v1038, 4294901760
  %v1164 = vsub.f32 %v1038, %v1163
  %v1165 = vand.u32 %v1164, 4294901760
  %v1166 = vsub.f32 %v1164, %v1165
  %v1167 = vand.u32 %v1166, 4294901760
  %1168 = vmatpush1.msra.mxu0 %v1167
  %1169 = vmatprep.subr.mxu0 0.0
  %v1170 = vand.u32 %v1039, 4294901760
  %v1171 = vsub.f32 %v1039, %v1170
  %v1172 = vand.u32 %v1171, 4294901760
  %v1173 = vsub.f32 %v1171, %v1172
  %v1174 = vand.u32 %v1173, 4294901760
  %1175 = vmatpush1.msra.mxu0 %v1174
  %1176 = vmatprep.subr.mxu0 0.0
  %v1177 = vand.u32 %v1040, 4294901760
  %v1178 = vsub.f32 %v1040, %v1177
  %v1179 = vand.u32 %v1178, 4294901760
  %v1180 = vsub.f32 %v1178, %v1179
  %v1181 = vand.u32 %v1180, 4294901760
  %1182 = vmatpush1.msra.mxu0 %v1181
  %1183 = vmatprep.subr.mxu0 0.0
  %v1184 = vand.u32 %v1041, 4294901760
  %v1185 = vsub.f32 %v1041, %v1184
  %v1186 = vand.u32 %v1185, 4294901760
  %v1187 = vsub.f32 %v1185, %v1186
  %v1188 = vand.u32 %v1187, 4294901760
  %1189 = vmatpush1.msra.mxu0 %v1188
  %1190 = vmatprep.subr.mxu0 0.0
  %v1191 = vand.u32 %v1042, 4294901760
  %v1192 = vsub.f32 %v1042, %v1191
  %v1193 = vand.u32 %v1192, 4294901760
  %v1194 = vsub.f32 %v1192, %v1193
  %v1195 = vand.u32 %v1194, 4294901760
  %1196 = vmatpush1.msra.mxu0 %v1195
  %1197 = vmatprep.subr.mxu0 0.0
  %v1198 = vand.u32 %v1043, 4294901760
  %v1199 = vsub.f32 %v1043, %v1198
  %v1200 = vand.u32 %v1199, 4294901760
  %v1201 = vsub.f32 %v1199, %v1200
  %v1202 = vand.u32 %v1201, 4294901760
  %1203 = vmatpush1.msra.mxu0 %v1202
  %1204 = vmatprep.subr.mxu0 0.0
  %v1205 = vand.u32 %v1044, 4294901760
  %v1206 = vsub.f32 %v1044, %v1205
  %v1207 = vand.u32 %v1206, 4294901760
  %v1208 = vsub.f32 %v1206, %v1207
  %v1209 = vand.u32 %v1208, 4294901760
  %1210 = vmatpush1.msra.mxu0 %v1209
  %1211 = vmatprep.subr.mxu0 0.0
  %v1212 = vand.u32 %v1045, 4294901760
  %v1213 = vsub.f32 %v1045, %v1212
  %v1214 = vand.u32 %v1213, 4294901760
  %v1215 = vsub.f32 %v1213, %v1214
  %v1216 = vand.u32 %v1215, 4294901760
  %1217 = vmatpush1.msra.mxu0 %v1216
  %1218 = vmatprep.subr.mxu0 0.0
  %v1219 = vand.u32 %v1046, 4294901760
  %v1220 = vsub.f32 %v1046, %v1219
  %v1221 = vand.u32 %v1220, 4294901760
  %v1222 = vsub.f32 %v1220, %v1221
  %v1223 = vand.u32 %v1222, 4294901760
  %1224 = vmatpush1.msra.mxu0 %v1223
  %1225 = vmatprep.subr.mxu0 0.0
  %v1226 = vand.u32 %v1047, 4294901760
  %v1227 = vsub.f32 %v1047, %v1226
  %v1228 = vand.u32 %v1227, 4294901760
  %v1229 = vsub.f32 %v1227, %v1228
  %v1230 = vand.u32 %v1229, 4294901760
  %1231 = vmatpush1.msra.mxu0 %v1230
  %1232 = vmatprep.subr.mxu0 0.0
  %v1233 = vand.u32 %v1048, 4294901760
  %v1234 = vsub.f32 %v1048, %v1233
  %v1235 = vand.u32 %v1234, 4294901760
  %v1236 = vsub.f32 %v1234, %v1235
  %v1237 = vand.u32 %v1236, 4294901760
  %1238 = vmatpush1.msra.mxu0 %v1237
  %1239 = vmatprep.subr.mxu0 0.0
  %v1240 = vand.u32 %v1049, 4294901760
  %v1241 = vsub.f32 %v1049, %v1240
  %v1242 = vand.u32 %v1241, 4294901760
  %v1243 = vsub.f32 %v1241, %v1242
  %v1244 = vand.u32 %v1243, 4294901760
  %1245 = vmatpush1.msra.mxu0 %v1244
  %1246 = vmatprep.subr.mxu0 0.0
  %v1247 = vand.u32 %v1050, 4294901760
  %v1248 = vsub.f32 %v1050, %v1247
  %v1249 = vand.u32 %v1248, 4294901760
  %v1250 = vsub.f32 %v1248, %v1249
  %v1251 = vand.u32 %v1250, 4294901760
  %1252 = vmatpush1.msra.mxu0 %v1251
  %1253 = vmatprep.subr.mxu0 0.0
  %v1254 = vand.u32 %v1051, 4294901760
  %v1255 = vsub.f32 %v1051, %v1254
  %v1256 = vand.u32 %v1255, 4294901760
  %v1257 = vsub.f32 %v1255, %v1256
  %v1258 = vand.u32 %v1257, 4294901760
  %1259 = vmatpush1.msra.mxu0 %v1258
  %1260 = vmatprep.subr.mxu0 0.0
  %1261 = vmatpush1.msra.mxu0 0.0
  %1262 = vmatprep.subr.mxu0 0.0
  %1263 = vmatpush1.msra.mxu0 0.0
  %1264 = vmatprep.subr.mxu0 0.0
  %1265 = vmatpush1.msra.mxu0 0.0
  %1266 = vmatprep.subr.mxu0 0.0
  %1267 = vmatpush1.msra.mxu0 0.0
  %1268 = vmatprep.subr.mxu0 0.0
  %1269 = vmatpush1.msra.mxu0 0.0
  %1270 = vmatprep.subr.mxu0 0.0
  %1271 = vmatpush1.msra.mxu0 0.0
  %1272 = vmatprep.subr.mxu0 0.0
  %1273 = vmatpush1.msra.mxu0 0.0
  %1274 = vmatprep.subr.mxu0 0.0
  %1275 = vmatpush1.msra.mxu0 0.0
  %1276 = vmatprep.subr.mxu0 0.0
  %1277 = vmatpush1.msra.mxu0 0.0
  %1278 = vmatprep.subr.mxu0 0.0
  %1279 = vmatpush1.msra.mxu0 0.0
  %1280 = vmatprep.subr.mxu0 0.0
  %1281 = vmatpush1.msra.mxu0 0.0
  %1282 = vmatprep.subr.mxu0 0.0
  %1283 = vmatpush1.msra.mxu0 0.0
  %1284 = vmatprep.subr.mxu0 0.0
  %1285 = vmatpush1.msra.mxu0 0.0
  %1286 = vmatprep.subr.mxu0 0.0
  %1287 = vmatpush1.msra.mxu0 0.0
  %1288 = vmatprep.subr.mxu0 0.0
  %1289 = vmatpush1.msra.mxu0 0.0
  %1290 = vmatprep.subr.mxu0 0.0
  %1291 = vmatpush1.msra.mxu0 0.0
  %1292 = vmatprep.mubr.f32.mxu0 0.0
  %v1293 = vand.u32 %v1035, 4294901760
  %1294 = vmatmul.mubr.f32.gmra.mrb[0].mxu0 %v1293
  %v1295 = vpop.f32.mrb[0].mxu0
  %v1296 = vadd.f32 %v1145, %v1295
  %v1297 = vpop.f32.mrb[0].mxu0
  %1298 = vdwg.mxu0
  %1299 = vmatprep.subr.mxu0 0.0
  %v1300 = vand.u32 %v1036, 4294901760
  %v1301 = vsub.f32 %v1036, %v1300
  %1302 = vmatpush1.msra.mxu0 %v1301
  %1303 = vmatprep.subr.mxu0 0.0
  %v1304 = vand.u32 %v1037, 4294901760
  %v1305 = vsub.f32 %v1037, %v1304
  %1306 = vmatpush1.msra.mxu0 %v1305
  %1307 = vmatprep.subr.mxu0 0.0
  %v1308 = vand.u32 %v1038, 4294901760
  %v1309 = vsub.f32 %v1038, %v1308
  %1310 = vmatpush1.msra.mxu0 %v1309
  %1311 = vmatprep.subr.mxu0 0.0
  %v1312 = vand.u32 %v1039, 4294901760
  %v1313 = vsub.f32 %v1039, %v1312
  %1314 = vmatpush1.msra.mxu0 %v1313
  %1315 = vmatprep.subr.mxu0 0.0
  %v1316 = vand.u32 %v1040, 4294901760
  %v1317 = vsub.f32 %v1040, %v1316
  %1318 = vmatpush1.msra.mxu0 %v1317
  %1319 = vmatprep.subr.mxu0 0.0
  %v1320 = vand.u32 %v1041, 4294901760
  %v1321 = vsub.f32 %v1041, %v1320
  %1322 = vmatpush1.msra.mxu0 %v1321
  %1323 = vmatprep.subr.mxu0 0.0
  %v1324 = vand.u32 %v1042, 4294901760
  %v1325 = vsub.f32 %v1042, %v1324
  %1326 = vmatpush1.msra.mxu0 %v1325
  %1327 = vmatprep.subr.mxu0 0.0
  %v1328 = vand.u32 %v1043, 4294901760
  %v1329 = vsub.f32 %v1043, %v1328
  %1330 = vmatpush1.msra.mxu0 %v1329
  %1331 = vmatprep.subr.mxu0 0.0
  %v1332 = vand.u32 %v1044, 4294901760
  %v1333 = vsub.f32 %v1044, %v1332
  %1334 = vmatpush1.msra.mxu0 %v1333
  %1335 = vmatprep.subr.mxu0 0.0
  %v1336 = vand.u32 %v1045, 4294901760
  %v1337 = vsub.f32 %v1045, %v1336
  %1338 = vmatpush1.msra.mxu0 %v1337
  %1339 = vmatprep.subr.mxu0 0.0
  %v1340 = vand.u32 %v1046, 4294901760
  %v1341 = vsub.f32 %v1046, %v1340
  %1342 = vmatpush1.msra.mxu0 %v1341
  %1343 = vmatprep.subr.mxu0 0.0
  %v1344 = vand.u32 %v1047, 4294901760
  %v1345 = vsub.f32 %v1047, %v1344
  %1346 = vmatpush1.msra.mxu0 %v1345
  %1347 = vmatprep.subr.mxu0 0.0
  %v1348 = vand.u32 %v1048, 4294901760
  %v1349 = vsub.f32 %v1048, %v1348
  %1350 = vmatpush1.msra.mxu0 %v1349
  %1351 = vmatprep.subr.mxu0 0.0
  %v1352 = vand.u32 %v1049, 4294901760
  %v1353 = vsub.f32 %v1049, %v1352
  %1354 = vmatpush1.msra.mxu0 %v1353
  %1355 = vmatprep.subr.mxu0 0.0
  %v1356 = vand.u32 %v1050, 4294901760
  %v1357 = vsub.f32 %v1050, %v1356
  %1358 = vmatpush1.msra.mxu0 %v1357
  %1359 = vmatprep.subr.mxu0 0.0
  %v1360 = vand.u32 %v1051, 4294901760
  %v1361 = vsub.f32 %v1051, %v1360
  %1362 = vmatpush1.msra.mxu0 %v1361
  %1363 = vmatprep.subr.mxu0 0.0
  %1364 = vmatpush1.msra.mxu0 0.0
  %1365 = vmatprep.subr.mxu0 0.0
  %1366 = vmatpush1.msra.mxu0 0.0
  %1367 = vmatprep.subr.mxu0 0.0
  %1368 = vmatpush1.msra.mxu0 0.0
  %1369 = vmatprep.subr.mxu0 0.0
  %1370 = vmatpush1.msra.mxu0 0.0
  %1371 = vmatprep.subr.mxu0 0.0
  %1372 = vmatpush1.msra.mxu0 0.0
  %1373 = vmatprep.subr.mxu0 0.0
  %1374 = vmatpush1.msra.mxu0 0.0
  %1375 = vmatprep.subr.mxu0 0.0
  %1376 = vmatpush1.msra.mxu0 0.0
  %1377 = vmatprep.subr.mxu0 0.0
  %1378 = vmatpush1.msra.mxu0 0.0
  %1379 = vmatprep.subr.mxu0 0.0
  %1380 = vmatpush1.msra.mxu0 0.0
  %1381 = vmatprep.subr.mxu0 0.0
  %1382 = vmatpush1.msra.mxu0 0.0
  %1383 = vmatprep.subr.mxu0 0.0
  %1384 = vmatpush1.msra.mxu0 0.0
  %1385 = vmatprep.subr.mxu0 0.0
  %1386 = vmatpush1.msra.mxu0 0.0
  %1387 = vmatprep.subr.mxu0 0.0
  %1388 = vmatpush1.msra.mxu0 0.0
  %1389 = vmatprep.subr.mxu0 0.0
  %1390 = vmatpush1.msra.mxu0 0.0
  %1391 = vmatprep.subr.mxu0 0.0
  %1392 = vmatpush1.msra.mxu0 0.0
  %1393 = vmatprep.subr.mxu0 0.0
  %1394 = vmatpush1.msra.mxu0 0.0
  %1395 = vmatprep.mubr.f32.mxu0 0.0
  %v1396 = vand.u32 %v1035, 4294901760
  %v1397 = vsub.f32 %v1035, %v1396
  %1398 = vmatmul.mubr.f32.gmra.mrb[0].mxu0 %v1397
  %v1399 = vpop.f32.mrb[0].mxu0
  %v1400 = vadd.f32 %v1296, %v1399
  %v1401 = vpop.f32.mrb[0].mxu0
  %1402 = vdwg.mxu0
  %1403 = vmatprep.subr.mxu0 0.0
  %v1404 = vand.u32 %v1036, 4294901760
  %1405 = vmatpush1.msra.mxu0 %v1404
  %1406 = vmatprep.subr.mxu0 0.0
  %v1407 = vand.u32 %v1037, 4294901760
  %1408 = vmatpush1.msra.mxu0 %v1407
  %1409 = vmatprep.subr.mxu0 0.0
  %v1410 = vand.u32 %v1038, 4294901760
  %1411 = vmatpush1.msra.mxu0 %v1410
  %1412 = vmatprep.subr.mxu0 0.0
  %v1413 = vand.u32 %v1039, 4294901760
  %1414 = vmatpush1.msra.mxu0 %v1413
  %1415 = vmatprep.subr.mxu0 0.0
  %v1416 = vand.u32 %v1040, 4294901760
  %1417 = vmatpush1.msra.mxu0 %v1416
  %1418 = vmatprep.subr.mxu0 0.0
  %v1419 = vand.u32 %v1041, 4294901760
  %1420 = vmatpush1.msra.mxu0 %v1419
  %1421 = vmatprep.subr.mxu0 0.0
  %v1422 = vand.u32 %v1042, 4294901760
  %1423 = vmatpush1.msra.mxu0 %v1422
  %1424 = vmatprep.subr.mxu0 0.0
  %v1425 = vand.u32 %v1043, 4294901760
  %1426 = vmatpush1.msra.mxu0 %v1425
  %1427 = vmatprep.subr.mxu0 0.0
  %v1428 = vand.u32 %v1044, 4294901760
  %1429 = vmatpush1.msra.mxu0 %v1428
  %1430 = vmatprep.subr.mxu0 0.0
  %v1431 = vand.u32 %v1045, 4294901760
  %1432 = vmatpush1.msra.mxu0 %v1431
  %1433 = vmatprep.subr.mxu0 0.0
  %v1434 = vand.u32 %v1046, 4294901760
  %1435 = vmatpush1.msra.mxu0 %v1434
  %1436 = vmatprep.subr.mxu0 0.0
  %v1437 = vand.u32 %v1047, 4294901760
  %1438 = vmatpush1.msra.mxu0 %v1437
  %1439 = vmatprep.subr.mxu0 0.0
  %v1440 = vand.u32 %v1048, 4294901760
  %1441 = vmatpush1.msra.mxu0 %v1440
  %1442 = vmatprep.subr.mxu0 0.0
  %v1443 = vand.u32 %v1049, 4294901760
  %1444 = vmatpush1.msra.mxu0 %v1443
  %1445 = vmatprep.subr.mxu0 0.0
  %v1446 = vand.u32 %v1050, 4294901760
  %1447 = vmatpush1.msra.mxu0 %v1446
  %1448 = vmatprep.subr.mxu0 0.0
  %v1449 = vand.u32 %v1051, 4294901760
  %1450 = vmatpush1.msra.mxu0 %v1449
  %1451 = vmatprep.subr.mxu0 0.0
  %1452 = vmatpush1.msra.mxu0 0.0
  %1453 = vmatprep.subr.mxu0 0.0
  %1454 = vmatpush1.msra.mxu0 0.0
  %1455 = vmatprep.subr.mxu0 0.0
  %1456 = vmatpush1.msra.mxu0 0.0
  %1457 = vmatprep.subr.mxu0 0.0
  %1458 = vmatpush1.msra.mxu0 0.0
  %1459 = vmatprep.subr.mxu0 0.0
  %1460 = vmatpush1.msra.mxu0 0.0
  %1461 = vmatprep.subr.mxu0 0.0
  %1462 = vmatpush1.msra.mxu0 0.0
  %1463 = vmatprep.subr.mxu0 0.0
  %1464 = vmatpush1.msra.mxu0 0.0
  %1465 = vmatprep.subr.mxu0 0.0
  %1466 = vmatpush1.msra.mxu0 0.0
  %1467 = vmatprep.subr.mxu0 0.0
  %1468 = vmatpush1.msra.mxu0 0.0
  %1469 = vmatprep.subr.mxu0 0.0
  %1470 = vmatpush1.msra.mxu0 0.0
  %1471 = vmatprep.subr.mxu0 0.0
  %1472 = vmatpush1.msra.mxu0 0.0
  %1473 = vmatprep.subr.mxu0 0.0
  %1474 = vmatpush1.msra.mxu0 0.0
  %1475 = vmatprep.subr.mxu0 0.0
  %1476 = vmatpush1.msra.mxu0 0.0
  %1477 = vmatprep.subr.mxu0 0.0
  %1478 = vmatpush1.msra.mxu0 0.0
  %1479 = vmatprep.subr.mxu0 0.0
  %1480 = vmatpush1.msra.mxu0 0.0
  %1481 = vmatprep.subr.mxu0 0.0
  %1482 = vmatpush1.msra.mxu0 0.0
  %1483 = vmatprep.mubr.f32.mxu0 0.0
  %v1484 = vand.u32 %v1035, 4294901760
  %v1485 = vsub.f32 %v1035, %v1484
  %v1486 = vand.u32 %v1485, 4294901760
  %1487 = vmatmul.mubr.f32.gmra.mrb[0].mxu0 %v1486
  %v1488 = vpop.f32.mrb[0].mxu0
  %v1489 = vadd.f32 %v1400, %v1488
  %v1490 = vpop.f32.mrb[0].mxu0
  %1491 = vdwg.mxu0
  %1492 = vmatprep.subr.mxu0 0.0
  %v1493 = vand.u32 %v1036, 4294901760
  %v1494 = vsub.f32 %v1036, %v1493
  %v1495 = vand.u32 %v1494, 4294901760
  %1496 = vmatpush1.msra.mxu0 %v1495
  %1497 = vmatprep.subr.mxu0 0.0
  %v1498 = vand.u32 %v1037, 4294901760
  %v1499 = vsub.f32 %v1037, %v1498
  %v1500 = vand.u32 %v1499, 4294901760
  %1501 = vmatpush1.msra.mxu0 %v1500
  %1502 = vmatprep.subr.mxu0 0.0
  %v1503 = vand.u32 %v1038, 4294901760
  %v1504 = vsub.f32 %v1038, %v1503
  %v1505 = vand.u32 %v1504, 4294901760
  %1506 = vmatpush1.msra.mxu0 %v1505
  %1507 = vmatprep.subr.mxu0 0.0
  %v1508 = vand.u32 %v1039, 4294901760
  %v1509 = vsub.f32 %v1039, %v1508
  %v1510 = vand.u32 %v1509, 4294901760
  %1511 = vmatpush1.msra.mxu0 %v1510
  %1512 = vmatprep.subr.mxu0 0.0
  %v1513 = vand.u32 %v1040, 4294901760
  %v1514 = vsub.f32 %v1040, %v1513
  %v1515 = vand.u32 %v1514, 4294901760
  %1516 = vmatpush1.msra.mxu0 %v1515
  %1517 = vmatprep.subr.mxu0 0.0
  %v1518 = vand.u32 %v1041, 4294901760
  %v1519 = vsub.f32 %v1041, %v1518
  %v1520 = vand.u32 %v1519, 4294901760
  %1521 = vmatpush1.msra.mxu0 %v1520
  %1522 = vmatprep.subr.mxu0 0.0
  %v1523 = vand.u32 %v1042, 4294901760
  %v1524 = vsub.f32 %v1042, %v1523
  %v1525 = vand.u32 %v1524, 4294901760
  %1526 = vmatpush1.msra.mxu0 %v1525
  %1527 = vmatprep.subr.mxu0 0.0
  %v1528 = vand.u32 %v1043, 4294901760
  %v1529 = vsub.f32 %v1043, %v1528
  %v1530 = vand.u32 %v1529, 4294901760
  %1531 = vmatpush1.msra.mxu0 %v1530
  %1532 = vmatprep.subr.mxu0 0.0
  %v1533 = vand.u32 %v1044, 4294901760
  %v1534 = vsub.f32 %v1044, %v1533
  %v1535 = vand.u32 %v1534, 4294901760
  %1536 = vmatpush1.msra.mxu0 %v1535
  %1537 = vmatprep.subr.mxu0 0.0
  %v1538 = vand.u32 %v1045, 4294901760
  %v1539 = vsub.f32 %v1045, %v1538
  %v1540 = vand.u32 %v1539, 4294901760
  %1541 = vmatpush1.msra.mxu0 %v1540
  %1542 = vmatprep.subr.mxu0 0.0
  %v1543 = vand.u32 %v1046, 4294901760
  %v1544 = vsub.f32 %v1046, %v1543
  %v1545 = vand.u32 %v1544, 4294901760
  %1546 = vmatpush1.msra.mxu0 %v1545
  %1547 = vmatprep.subr.mxu0 0.0
  %v1548 = vand.u32 %v1047, 4294901760
  %v1549 = vsub.f32 %v1047, %v1548
  %v1550 = vand.u32 %v1549, 4294901760
  %1551 = vmatpush1.msra.mxu0 %v1550
  %1552 = vmatprep.subr.mxu0 0.0
  %v1553 = vand.u32 %v1048, 4294901760
  %v1554 = vsub.f32 %v1048, %v1553
  %v1555 = vand.u32 %v1554, 4294901760
  %1556 = vmatpush1.msra.mxu0 %v1555
  %1557 = vmatprep.subr.mxu0 0.0
  %v1558 = vand.u32 %v1049, 4294901760
  %v1559 = vsub.f32 %v1049, %v1558
  %v1560 = vand.u32 %v1559, 4294901760
  %1561 = vmatpush1.msra.mxu0 %v1560
  %1562 = vmatprep.subr.mxu0 0.0
  %v1563 = vand.u32 %v1050, 4294901760
  %v1564 = vsub.f32 %v1050, %v1563
  %v1565 = vand.u32 %v1564, 4294901760
  %1566 = vmatpush1.msra.mxu0 %v1565
  %1567 = vmatprep.subr.mxu0 0.0
  %v1568 = vand.u32 %v1051, 4294901760
  %v1569 = vsub.f32 %v1051, %v1568
  %v1570 = vand.u32 %v1569, 4294901760
  %1571 = vmatpush1.msra.mxu0 %v1570
  %1572 = vmatprep.subr.mxu0 0.0
  %1573 = vmatpush1.msra.mxu0 0.0
  %1574 = vmatprep.subr.mxu0 0.0
  %1575 = vmatpush1.msra.mxu0 0.0
  %1576 = vmatprep.subr.mxu0 0.0
  %1577 = vmatpush1.msra.mxu0 0.0
  %1578 = vmatprep.subr.mxu0 0.0
  %1579 = vmatpush1.msra.mxu0 0.0
  %1580 = vmatprep.subr.mxu0 0.0
  %1581 = vmatpush1.msra.mxu0 0.0
  %1582 = vmatprep.subr.mxu0 0.0
  %1583 = vmatpush1.msra.mxu0 0.0
  %1584 = vmatprep.subr.mxu0 0.0
  %1585 = vmatpush1.msra.mxu0 0.0
  %1586 = vmatprep.subr.mxu0 0.0
  %1587 = vmatpush1.msra.mxu0 0.0
  %1588 = vmatprep.subr.mxu0 0.0
  %1589 = vmatpush1.msra.mxu0 0.0
  %1590 = vmatprep.subr.mxu0 0.0
  %1591 = vmatpush1.msra.mxu0 0.0
  %1592 = vmatprep.subr.mxu0 0.0
  %1593 = vmatpush1.msra.mxu0 0.0
  %1594 = vmatprep.subr.mxu0 0.0
  %1595 = vmatpush1.msra.mxu0 0.0
  %1596 = vmatprep.subr.mxu0 0.0
  %1597 = vmatpush1.msra.mxu0 0.0
  %1598 = vmatprep.subr.mxu0 0.0
  %1599 = vmatpush1.msra.mxu0 0.0
  %1600 = vmatprep.subr.mxu0 0.0
  %1601 = vmatpush1.msra.mxu0 0.0
  %1602 = vmatprep.subr.mxu0 0.0
  %1603 = vmatpush1.msra.mxu0 0.0
  %1604 = vmatprep.mubr.f32.mxu0 0.0
  %v1605 = vand.u32 %v1035, 4294901760
  %1606 = vmatmul.mubr.f32.gmra.mrb[0].mxu0 %v1605
  %v1607 = vpop.f32.mrb[0].mxu0
  %v1608 = vadd.f32 %v1489, %v1607
  %v1609 = vpop.f32.mrb[0].mxu0
  %1610 = vdwg.mxu0
  %1611 = vmatprep.subr.mxu0 0.0
  %v1612 = vand.u32 %v1036, 4294901760
  %1613 = vmatpush1.msra.mxu0 %v1612
  %1614 = vmatprep.subr.mxu0 0.0
  %v1615 = vand.u32 %v1037, 4294901760
  %1616 = vmatpush1.msra.mxu0 %v1615
  %1617 = vmatprep.subr.mxu0 0.0
  %v1618 = vand.u32 %v1038, 4294901760
  %1619 = vmatpush1.msra.mxu0 %v1618
  %1620 = vmatprep.subr.mxu0 0.0
  %v1621 = vand.u32 %v1039, 4294901760
  %1622 = vmatpush1.msra.mxu0 %v1621
  %1623 = vmatprep.subr.mxu0 0.0
  %v1624 = vand.u32 %v1040, 4294901760
  %1625 = vmatpush1.msra.mxu0 %v1624
  %1626 = vmatprep.subr.mxu0 0.0
  %v1627 = vand.u32 %v1041, 4294901760
  %1628 = vmatpush1.msra.mxu0 %v1627
  %1629 = vmatprep.subr.mxu0 0.0
  %v1630 = vand.u32 %v1042, 4294901760
  %1631 = vmatpush1.msra.mxu0 %v1630
  %1632 = vmatprep.subr.mxu0 0.0
  %v1633 = vand.u32 %v1043, 4294901760
  %1634 = vmatpush1.msra.mxu0 %v1633
  %1635 = vmatprep.subr.mxu0 0.0
  %v1636 = vand.u32 %v1044, 4294901760
  %1637 = vmatpush1.msra.mxu0 %v1636
  %1638 = vmatprep.subr.mxu0 0.0
  %v1639 = vand.u32 %v1045, 4294901760
  %1640 = vmatpush1.msra.mxu0 %v1639
  %1641 = vmatprep.subr.mxu0 0.0
  %v1642 = vand.u32 %v1046, 4294901760
  %1643 = vmatpush1.msra.mxu0 %v1642
  %1644 = vmatprep.subr.mxu0 0.0
  %v1645 = vand.u32 %v1047, 4294901760
  %1646 = vmatpush1.msra.mxu0 %v1645
  %1647 = vmatprep.subr.mxu0 0.0
  %v1648 = vand.u32 %v1048, 4294901760
  %1649 = vmatpush1.msra.mxu0 %v1648
  %1650 = vmatprep.subr.mxu0 0.0
  %v1651 = vand.u32 %v1049, 4294901760
  %1652 = vmatpush1.msra.mxu0 %v1651
  %1653 = vmatprep.subr.mxu0 0.0
  %v1654 = vand.u32 %v1050, 4294901760
  %1655 = vmatpush1.msra.mxu0 %v1654
  %1656 = vmatprep.subr.mxu0 0.0
  %v1657 = vand.u32 %v1051, 4294901760
  %1658 = vmatpush1.msra.mxu0 %v1657
  %1659 = vmatprep.subr.mxu0 0.0
  %1660 = vmatpush1.msra.mxu0 0.0
  %1661 = vmatprep.subr.mxu0 0.0
  %1662 = vmatpush1.msra.mxu0 0.0
  %1663 = vmatprep.subr.mxu0 0.0
  %1664 = vmatpush1.msra.mxu0 0.0
  %1665 = vmatprep.subr.mxu0 0.0
  %1666 = vmatpush1.msra.mxu0 0.0
  %1667 = vmatprep.subr.mxu0 0.0
  %1668 = vmatpush1.msra.mxu0 0.0
  %1669 = vmatprep.subr.mxu0 0.0
  %1670 = vmatpush1.msra.mxu0 0.0
  %1671 = vmatprep.subr.mxu0 0.0
  %1672 = vmatpush1.msra.mxu0 0.0
  %1673 = vmatprep.subr.mxu0 0.0
  %1674 = vmatpush1.msra.mxu0 0.0
  %1675 = vmatprep.subr.mxu0 0.0
  %1676 = vmatpush1.msra.mxu0 0.0
  %1677 = vmatprep.subr.mxu0 0.0
  %1678 = vmatpush1.msra.mxu0 0.0
  %1679 = vmatprep.subr.mxu0 0.0
  %1680 = vmatpush1.msra.mxu0 0.0
  %1681 = vmatprep.subr.mxu0 0.0
  %1682 = vmatpush1.msra.mxu0 0.0
  %1683 = vmatprep.subr.mxu0 0.0
  %1684 = vmatpush1.msra.mxu0 0.0
  %1685 = vmatprep.subr.mxu0 0.0
  %1686 = vmatpush1.msra.mxu0 0.0
  %1687 = vmatprep.subr.mxu0 0.0
  %1688 = vmatpush1.msra.mxu0 0.0
  %1689 = vmatprep.subr.mxu0 0.0
  %1690 = vmatpush1.msra.mxu0 0.0
  %1691 = vmatprep.mubr.f32.mxu0 0.0
  %v1692 = vand.u32 %v1035, 4294901760
  %1693 = vmatmul.mubr.f32.gmra.mrb[0].mxu0 %v1692
  %v1694 = vpop.f32.mrb[0].mxu0
  %v1695 = vadd.f32 %v1608, %v1694
  %v1696 = vpop.f32.mrb[0].mxu0
  %1697 = vdwg.mxu0
  %v1698 = vmax.f32 %v1695, 0.0
  %v1699 = vld [vmem:[%s4] sm:$0xff]
  %v1700 = vld [vmem:[%s4 + $0x8] sm:$0xff]
  %v1701 = vld [vmem:[%s4 + $0x10] sm:$0xff]
  %v1702 = vld [vmem:[%s4 + $0x18] sm:$0xff]
  %v1703 = vld [vmem:[%s4 + $0x20] sm:$0xff]
  %v1704 = vld [vmem:[%s4 + $0x28] sm:$0xff]
  %v1705 = vld [vmem:[%s4 + $0x30] sm:$0xff]
  %v1706 = vld [vmem:[%s4 + $0x38] sm:$0xff]
  %v1708 = vsel %vm494, %v1698, 0
  %1710 = vmatprep.subr.mxu0 0.0
  %v1711 = vand.u32 %v1699, 4294901760
  %1712 = vmatpush1.msra.mxu0 %v1711
  %1713 = vmatprep.subr.mxu0 0.0
  %v1714 = vand.u32 %v1700, 4294901760
  %1715 = vmatpush1.msra.mxu0 %v1714
  %1716 = vmatprep.subr.mxu0 0.0
  %v1717 = vand.u32 %v1701, 4294901760
  %1718 = vmatpush1.msra.mxu0 %v1717
  %1719 = vmatprep.subr.mxu0 0.0
  %v1720 = vand.u32 %v1702, 4294901760
  %1721 = vmatpush1.msra.mxu0 %v1720
  %1722 = vmatprep.subr.mxu0 0.0
  %v1723 = vand.u32 %v1703, 4294901760
  %1724 = vmatpush1.msra.mxu0 %v1723
  %1725 = vmatprep.subr.mxu0 0.0
  %v1726 = vand.u32 %v1704, 4294901760
  %1727 = vmatpush1.msra.mxu0 %v1726
  %1728 = vmatprep.subr.mxu0 0.0
  %v1729 = vand.u32 %v1705, 4294901760
  %1730 = vmatpush1.msra.mxu0 %v1729
  %1731 = vmatprep.subr.mxu0 0.0
  %v1732 = vand.u32 %v1706, 4294901760
  %1733 = vmatpush1.msra.mxu0 %v1732
  %1734 = vmatprep.subr.mxu0 0.0
  %1735 = vmatpush1.msra.mxu0 0.0
  %1736 = vmatprep.subr.mxu0 0.0
  %1737 = vmatpush1.msra.mxu0 0.0
  %1738 = vmatprep.subr.mxu0 0.0
  %1739 = vmatpush1.msra.mxu0 0.0
  %1740 = vmatprep.subr.mxu0 0.0
  %1741 = vmatpush1.msra.mxu0 0.0
  %1742 = vmatprep.subr.mxu0 0.0
  %1743 = vmatpush1.msra.mxu0 0.0
  %1744 = vmatprep.subr.mxu0 0.0
  %1745 = vmatpush1.msra.mxu0 0.0
  %1746 = vmatprep.subr.mxu0 0.0
  %1747 = vmatpush1.msra.mxu0 0.0
  %1748 = vmatprep.subr.mxu0 0.0
  %1749 = vmatpush1.msra.mxu0 0.0
  %1750 = vmatprep.subr.mxu0 0.0
  %1751 = vmatpush1.msra.mxu0 0.0
  %1752 = vmatprep.subr.mxu0 0.0
  %1753 = vmatpush1.msra.mxu0 0.0
  %1754 = vmatprep.subr.mxu0 0.0
  %1755 = vmatpush1.msra.mxu0 0.0
  %1756 = vmatprep.subr.mxu0 0.0
  %1757 = vmatpush1.msra.mxu0 0.0
  %1758 = vmatprep.subr.mxu0 0.0
  %1759 = vmatpush1.msra.mxu0 0.0
  %1760 = vmatprep.subr.mxu0 0.0
  %1761 = vmatpush1.msra.mxu0 0.0
  %1762 = vmatprep.subr.mxu0 0.0
  %1763 = vmatpush1.msra.mxu0 0.0
  %1764 = vmatprep.subr.mxu0 0.0
  %1765 = vmatpush1.msra.mxu0 0.0
  %1766 = vmatprep.subr.mxu0 0.0
  %1767 = vmatpush1.msra.mxu0 0.0
  %1768 = vmatprep.subr.mxu0 0.0
  %1769 = vmatpush1.msra.mxu0 0.0
  %1770 = vmatprep.subr.mxu0 0.0
  %1771 = vmatpush1.msra.mxu0 0.0
  %1772 = vmatprep.subr.mxu0 0.0
  %1773 = vmatpush1.msra.mxu0 0.0
  %1774 = vmatprep.subr.mxu0 0.0
  %1775 = vmatpush1.msra.mxu0 0.0
  %1776 = vmatprep.subr.mxu0 0.0
  %1777 = vmatpush1.msra.mxu0 0.0
  %1778 = vmatprep.subr.mxu0 0.0
  %1779 = vmatpush1.msra.mxu0 0.0
  %1780 = vmatprep.subr.mxu0 0.0
  %1781 = vmatpush1.msra.mxu0 0.0
  %1782 = vmatprep.mubr.f32.mxu0 0.0
  %v1783 = vand.u32 %v1708, 4294901760
  %v1784 = vsub.f32 %v1708, %v1783
  %v1785 = vand.u32 %v1784, 4294901760
  %v1786 = vsub.f32 %v1784, %v1785
  %v1787 = vand.u32 %v1786, 4294901760
  %1788 = vmatmul.mubr.f32.gmra.mrb[0].mxu0 %v1787
  %v1789 = vpop.f32.mrb[0].mxu0
  %v1790 = vadd.f32 0.0, %v1789
  %v1791 = vpop.f32.mrb[0].mxu0
  %1792 = vdwg.mxu0
  %1793 = vmatprep.subr.mxu0 0.0
  %v1794 = vand.u32 %v1699, 4294901760
  %v1795 = vsub.f32 %v1699, %v1794
  %v1796 = vand.u32 %v1795, 4294901760
  %v1797 = vsub.f32 %v1795, %v1796
  %v1798 = vand.u32 %v1797, 4294901760
  %1799 = vmatpush1.msra.mxu0 %v1798
  %1800 = vmatprep.subr.mxu0 0.0
  %v1801 = vand.u32 %v1700, 4294901760
  %v1802 = vsub.f32 %v1700, %v1801
  %v1803 = vand.u32 %v1802, 4294901760
  %v1804 = vsub.f32 %v1802, %v1803
  %v1805 = vand.u32 %v1804, 4294901760
  %1806 = vmatpush1.msra.mxu0 %v1805
  %1807 = vmatprep.subr.mxu0 0.0
  %v1808 = vand.u32 %v1701, 4294901760
  %v1809 = vsub.f32 %v1701, %v1808
  %v1810 = vand.u32 %v1809, 4294901760
  %v1811 = vsub.f32 %v1809, %v1810
  %v1812 = vand.u32 %v1811, 4294901760
  %1813 = vmatpush1.msra.mxu0 %v1812
  %1814 = vmatprep.subr.mxu0 0.0
  %v1815 = vand.u32 %v1702, 4294901760
  %v1816 = vsub.f32 %v1702, %v1815
  %v1817 = vand.u32 %v1816, 4294901760
  %v1818 = vsub.f32 %v1816, %v1817
  %v1819 = vand.u32 %v1818, 4294901760
  %1820 = vmatpush1.msra.mxu0 %v1819
  %1821 = vmatprep.subr.mxu0 0.0
  %v1822 = vand.u32 %v1703, 4294901760
  %v1823 = vsub.f32 %v1703, %v1822
  %v1824 = vand.u32 %v1823, 4294901760
  %v1825 = vsub.f32 %v1823, %v1824
  %v1826 = vand.u32 %v1825, 4294901760
  %1827 = vmatpush1.msra.mxu0 %v1826
  %1828 = vmatprep.subr.mxu0 0.0
  %v1829 = vand.u32 %v1704, 4294901760
  %v1830 = vsub.f32 %v1704, %v1829
  %v1831 = vand.u32 %v1830, 4294901760
  %v1832 = vsub.f32 %v1830, %v1831
  %v1833 = vand.u32 %v1832, 4294901760
  %1834 = vmatpush1.msra.mxu0 %v1833
  %1835 = vmatprep.subr.mxu0 0.0
  %v1836 = vand.u32 %v1705, 4294901760
  %v1837 = vsub.f32 %v1705, %v1836
  %v1838 = vand.u32 %v1837, 4294901760
  %v1839 = vsub.f32 %v1837, %v1838
  %v1840 = vand.u32 %v1839, 4294901760
  %1841 = vmatpush1.msra.mxu0 %v1840
  %1842 = vmatprep.subr.mxu0 0.0
  %v1843 = vand.u32 %v1706, 4294901760
  %v1844 = vsub.f32 %v1706, %v1843
  %v1845 = vand.u32 %v1844, 4294901760
  %v1846 = vsub.f32 %v1844, %v1845
  %v1847 = vand.u32 %v1846, 4294901760
  %1848 = vmatpush1.msra.mxu0 %v1847
  %1849 = vmatprep.subr.mxu0 0.0
  %1850 = vmatpush1.msra.mxu0 0.0
  %1851 = vmatprep.subr.mxu0 0.0
  %1852 = vmatpush1.msra.mxu0 0.0
  %1853 = vmatprep.subr.mxu0 0.0
  %1854 = vmatpush1.msra.mxu0 0.0
  %1855 = vmatprep.subr.mxu0 0.0
  %1856 = vmatpush1.msra.mxu0 0.0
  %1857 = vmatprep.subr.mxu0 0.0
  %1858 = vmatpush1.msra.mxu0 0.0
  %1859 = vmatprep.subr.mxu0 0.0
  %1860 = vmatpush1.msra.mxu0 0.0
  %1861 = vmatprep.subr.mxu0 0.0
  %1862 = vmatpush1.msra.mxu0 0.0
  %1863 = vmatprep.subr.mxu0 0.0
  %1864 = vmatpush1.msra.mxu0 0.0
  %1865 = vmatprep.subr.mxu0 0.0
  %1866 = vmatpush1.msra.mxu0 0.0
  %1867 = vmatprep.subr.mxu0 0.0
  %1868 = vmatpush1.msra.mxu0 0.0
  %1869 = vmatprep.subr.mxu0 0.0
  %1870 = vmatpush1.msra.mxu0 0.0
  %1871 = vmatprep.subr.mxu0 0.0
  %1872 = vmatpush1.msra.mxu0 0.0
  %1873 = vmatprep.subr.mxu0 0.0
  %1874 = vmatpush1.msra.mxu0 0.0
  %1875 = vmatprep.subr.mxu0 0.0
  %1876 = vmatpush1.msra.mxu0 0.0
  %1877 = vmatprep.subr.mxu0 0.0
  %1878 = vmatpush1.msra.mxu0 0.0
  %1879 = vmatprep.subr.mxu0 0.0
  %1880 = vmatpush1.msra.mxu0 0.0
  %1881 = vmatprep.subr.mxu0 0.0
  %1882 = vmatpush1.msra.mxu0 0.0
  %1883 = vmatprep.subr.mxu0 0.0
  %1884 = vmatpush1.msra.mxu0 0.0
  %1885 = vmatprep.subr.mxu0 0.0
  %1886 = vmatpush1.msra.mxu0 0.0
  %1887 = vmatprep.subr.mxu0 0.0
  %1888 = vmatpush1.msra.mxu0 0.0
  %1889 = vmatprep.subr.mxu0 0.0
  %1890 = vmatpush1.msra.mxu0 0.0
  %1891 = vmatprep.subr.mxu0 0.0
  %1892 = vmatpush1.msra.mxu0 0.0
  %1893 = vmatprep.subr.mxu0 0.0
  %1894 = vmatpush1.msra.mxu0 0.0
  %1895 = vmatprep.subr.mxu0 0.0
  %1896 = vmatpush1.msra.mxu0 0.0
  %1897 = vmatprep.mubr.f32.mxu0 0.0
  %v1898 = vand.u32 %v1708, 4294901760
  %1899 = vmatmul.mubr.f32.gmra.mrb[0].mxu0 %v1898
  %v1900 = vpop.f32.mrb[0].mxu0
  %v1901 = vadd.f32 %v1790, %v1900
  %v1902 = vpop.f32.mrb[0].mxu0
  %1903 = vdwg.mxu0
  %1904 = vmatprep.subr.mxu0 0.0
  %v1905 = vand.u32 %v1699, 4294901760
  %v1906 = vsub.f32 %v1699, %v1905
  %1907 = vmatpush1.msra.mxu0 %v1906
  %1908 = vmatprep.subr.mxu0 0.0
  %v1909 = vand.u32 %v1700, 4294901760
  %v1910 = vsub.f32 %v1700, %v1909
  %1911 = vmatpush1.msra.mxu0 %v1910
  %1912 = vmatprep.subr.mxu0 0.0
  %v1913 = vand.u32 %v1701, 4294901760
  %v1914 = vsub.f32 %v1701, %v1913
  %1915 = vmatpush1.msra.mxu0 %v1914
  %1916 = vmatprep.subr.mxu0 0.0
  %v1917 = vand.u32 %v1702, 4294901760
  %v1918 = vsub.f32 %v1702, %v1917
  %1919 = vmatpush1.msra.mxu0 %v1918
  %1920 = vmatprep.subr.mxu0 0.0
  %v1921 = vand.u32 %v1703, 4294901760
  %v1922 = vsub.f32 %v1703, %v1921
  %1923 = vmatpush1.msra.mxu0 %v1922
  %1924 = vmatprep.subr.mxu0 0.0
  %v1925 = vand.u32 %v1704, 4294901760
  %v1926 = vsub.f32 %v1704, %v1925
  %1927 = vmatpush1.msra.mxu0 %v1926
  %1928 = vmatprep.subr.mxu0 0.0
  %v1929 = vand.u32 %v1705, 4294901760
  %v1930 = vsub.f32 %v1705, %v1929
  %1931 = vmatpush1.msra.mxu0 %v1930
  %1932 = vmatprep.subr.mxu0 0.0
  %v1933 = vand.u32 %v1706, 4294901760
  %v1934 = vsub.f32 %v1706, %v1933
  %1935 = vmatpush1.msra.mxu0 %v1934
  %1936 = vmatprep.subr.mxu0 0.0
  %1937 = vmatpush1.msra.mxu0 0.0
  %1938 = vmatprep.subr.mxu0 0.0
  %1939 = vmatpush1.msra.mxu0 0.0
  %1940 = vmatprep.subr.mxu0 0.0
  %1941 = vmatpush1.msra.mxu0 0.0
  %1942 = vmatprep.subr.mxu0 0.0
  %1943 = vmatpush1.msra.mxu0 0.0
  %1944 = vmatprep.subr.mxu0 0.0
  %1945 = vmatpush1.msra.mxu0 0.0
  %1946 = vmatprep.subr.mxu0 0.0
  %1947 = vmatpush1.msra.mxu0 0.0
  %1948 = vmatprep.subr.mxu0 0.0
  %1949 = vmatpush1.msra.mxu0 0.0
  %1950 = vmatprep.subr.mxu0 0.0
  %1951 = vmatpush1.msra.mxu0 0.0
  %1952 = vmatprep.subr.mxu0 0.0
  %1953 = vmatpush1.msra.mxu0 0.0
  %1954 = vmatprep.subr.mxu0 0.0
  %1955 = vmatpush1.msra.mxu0 0.0
  %1956 = vmatprep.subr.mxu0 0.0
  %1957 = vmatpush1.msra.mxu0 0.0
  %1958 = vmatprep.subr.mxu0 0.0
  %1959 = vmatpush1.msra.mxu0 0.0
  %1960 = vmatprep.subr.mxu0 0.0
  %1961 = vmatpush1.msra.mxu0 0.0
  %1962 = vmatprep.subr.mxu0 0.0
  %1963 = vmatpush1.msra.mxu0 0.0
  %1964 = vmatprep.subr.mxu0 0.0
  %1965 = vmatpush1.msra.mxu0 0.0
  %1966 = vmatprep.subr.mxu0 0.0
  %1967 = vmatpush1.msra.mxu0 0.0
  %1968 = vmatprep.subr.mxu0 0.0
  %1969 = vmatpush1.msra.mxu0 0.0
  %1970 = vmatprep.subr.mxu0 0.0
  %1971 = vmatpush1.msra.mxu0 0.0
  %1972 = vmatprep.subr.mxu0 0.0
  %1973 = vmatpush1.msra.mxu0 0.0
  %1974 = vmatprep.subr.mxu0 0.0
  %1975 = vmatpush1.msra.mxu0 0.0
  %1976 = vmatprep.subr.mxu0 0.0
  %1977 = vmatpush1.msra.mxu0 0.0
  %1978 = vmatprep.subr.mxu0 0.0
  %1979 = vmatpush1.msra.mxu0 0.0
  %1980 = vmatprep.subr.mxu0 0.0
  %1981 = vmatpush1.msra.mxu0 0.0
  %1982 = vmatprep.subr.mxu0 0.0
  %1983 = vmatpush1.msra.mxu0 0.0
  %1984 = vmatprep.mubr.f32.mxu0 0.0
  %v1985 = vand.u32 %v1708, 4294901760
  %v1986 = vsub.f32 %v1708, %v1985
  %1987 = vmatmul.mubr.f32.gmra.mrb[0].mxu0 %v1986
  %v1988 = vpop.f32.mrb[0].mxu0
  %v1989 = vadd.f32 %v1901, %v1988
  %v1990 = vpop.f32.mrb[0].mxu0
  %1991 = vdwg.mxu0
  %1992 = vmatprep.subr.mxu0 0.0
  %v1993 = vand.u32 %v1699, 4294901760
  %1994 = vmatpush1.msra.mxu0 %v1993
  %1995 = vmatprep.subr.mxu0 0.0
  %v1996 = vand.u32 %v1700, 4294901760
  %1997 = vmatpush1.msra.mxu0 %v1996
  %1998 = vmatprep.subr.mxu0 0.0
  %v1999 = vand.u32 %v1701, 4294901760
  %2000 = vmatpush1.msra.mxu0 %v1999
  %2001 = vmatprep.subr.mxu0 0.0
  %v2002 = vand.u32 %v1702, 4294901760
  %2003 = vmatpush1.msra.mxu0 %v2002
  %2004 = vmatprep.subr.mxu0 0.0
  %v2005 = vand.u32 %v1703, 4294901760
  %2006 = vmatpush1.msra.mxu0 %v2005
  %2007 = vmatprep.subr.mxu0 0.0
  %v2008 = vand.u32 %v1704, 4294901760
  %2009 = vmatpush1.msra.mxu0 %v2008
  %2010 = vmatprep.subr.mxu0 0.0
  %v2011 = vand.u32 %v1705, 4294901760
  %2012 = vmatpush1.msra.mxu0 %v2011
  %2013 = vmatprep.subr.mxu0 0.0
  %v2014 = vand.u32 %v1706, 4294901760
  %2015 = vmatpush1.msra.mxu0 %v2014
  %2016 = vmatprep.subr.mxu0 0.0
  %2017 = vmatpush1.msra.mxu0 0.0
  %2018 = vmatprep.subr.mxu0 0.0
  %2019 = vmatpush1.msra.mxu0 0.0
  %2020 = vmatprep.subr.mxu0 0.0
  %2021 = vmatpush1.msra.mxu0 0.0
  %2022 = vmatprep.subr.mxu0 0.0
  %2023 = vmatpush1.msra.mxu0 0.0
  %2024 = vmatprep.subr.mxu0 0.0
  %2025 = vmatpush1.msra.mxu0 0.0
  %2026 = vmatprep.subr.mxu0 0.0
  %2027 = vmatpush1.msra.mxu0 0.0
  %2028 = vmatprep.subr.mxu0 0.0
  %2029 = vmatpush1.msra.mxu0 0.0
  %2030 = vmatprep.subr.mxu0 0.0
  %2031 = vmatpush1.msra.mxu0 0.0
  %2032 = vmatprep.subr.mxu0 0.0
  %2033 = vmatpush1.msra.mxu0 0.0
  %2034 = vmatprep.subr.mxu0 0.0
  %2035 = vmatpush1.msra.mxu0 0.0
  %2036 = vmatprep.subr.mxu0 0.0
  %2037 = vmatpush1.msra.mxu0 0.0
  %2038 = vmatprep.subr.mxu0 0.0
  %2039 = vmatpush1.msra.mxu0 0.0
  %2040 = vmatprep.subr.mxu0 0.0
  %2041 = vmatpush1.msra.mxu0 0.0
  %2042 = vmatprep.subr.mxu0 0.0
  %2043 = vmatpush1.msra.mxu0 0.0
  %2044 = vmatprep.subr.mxu0 0.0
  %2045 = vmatpush1.msra.mxu0 0.0
  %2046 = vmatprep.subr.mxu0 0.0
  %2047 = vmatpush1.msra.mxu0 0.0
  %2048 = vmatprep.subr.mxu0 0.0
  %2049 = vmatpush1.msra.mxu0 0.0
  %2050 = vmatprep.subr.mxu0 0.0
  %2051 = vmatpush1.msra.mxu0 0.0
  %2052 = vmatprep.subr.mxu0 0.0
  %2053 = vmatpush1.msra.mxu0 0.0
  %2054 = vmatprep.subr.mxu0 0.0
  %2055 = vmatpush1.msra.mxu0 0.0
  %2056 = vmatprep.subr.mxu0 0.0
  %2057 = vmatpush1.msra.mxu0 0.0
  %2058 = vmatprep.subr.mxu0 0.0
  %2059 = vmatpush1.msra.mxu0 0.0
  %2060 = vmatprep.subr.mxu0 0.0
  %2061 = vmatpush1.msra.mxu0 0.0
  %2062 = vmatprep.subr.mxu0 0.0
  %2063 = vmatpush1.msra.mxu0 0.0
  %2064 = vmatprep.mubr.f32.mxu0 0.0
  %v2065 = vand.u32 %v1708, 4294901760
  %v2066 = vsub.f32 %v1708, %v2065
  %v2067 = vand.u32 %v2066, 4294901760
  %2068 = vmatmul.mubr.f32.gmra.mrb[0].mxu0 %v2067
  %v2069 = vpop.f32.mrb[0].mxu0
  %v2070 = vadd.f32 %v1989, %v2069
  %v2071 = vpop.f32.mrb[0].mxu0
  %2072 = vdwg.mxu0
  %2073 = vmatprep.subr.mxu0 0.0
  %v2074 = vand.u32 %v1699, 4294901760
  %v2075 = vsub.f32 %v1699, %v2074
  %v2076 = vand.u32 %v2075, 4294901760
  %2077 = vmatpush1.msra.mxu0 %v2076
  %2078 = vmatprep.subr.mxu0 0.0
  %v2079 = vand.u32 %v1700, 4294901760
  %v2080 = vsub.f32 %v1700, %v2079
  %v2081 = vand.u32 %v2080, 4294901760
  %2082 = vmatpush1.msra.mxu0 %v2081
  %2083 = vmatprep.subr.mxu0 0.0
  %v2084 = vand.u32 %v1701, 4294901760
  %v2085 = vsub.f32 %v1701, %v2084
  %v2086 = vand.u32 %v2085, 4294901760
  %2087 = vmatpush1.msra.mxu0 %v2086
  %2088 = vmatprep.subr.mxu0 0.0
  %v2089 = vand.u32 %v1702, 4294901760
  %v2090 = vsub.f32 %v1702, %v2089
  %v2091 = vand.u32 %v2090, 4294901760
  %2092 = vmatpush1.msra.mxu0 %v2091
  %2093 = vmatprep.subr.mxu0 0.0
  %v2094 = vand.u32 %v1703, 4294901760
  %v2095 = vsub.f32 %v1703, %v2094
  %v2096 = vand.u32 %v2095, 4294901760
  %2097 = vmatpush1.msra.mxu0 %v2096
  %2098 = vmatprep.subr.mxu0 0.0
  %v2099 = vand.u32 %v1704, 4294901760
  %v2100 = vsub.f32 %v1704, %v2099
  %v2101 = vand.u32 %v2100, 4294901760
  %2102 = vmatpush1.msra.mxu0 %v2101
  %2103 = vmatprep.subr.mxu0 0.0
  %v2104 = vand.u32 %v1705, 4294901760
  %v2105 = vsub.f32 %v1705, %v2104
  %v2106 = vand.u32 %v2105, 4294901760
  %2107 = vmatpush1.msra.mxu0 %v2106
  %2108 = vmatprep.subr.mxu0 0.0
  %v2109 = vand.u32 %v1706, 4294901760
  %v2110 = vsub.f32 %v1706, %v2109
  %v2111 = vand.u32 %v2110, 4294901760
  %2112 = vmatpush1.msra.mxu0 %v2111
  %2113 = vmatprep.subr.mxu0 0.0
  %2114 = vmatpush1.msra.mxu0 0.0
  %2115 = vmatprep.subr.mxu0 0.0
  %2116 = vmatpush1.msra.mxu0 0.0
  %2117 = vmatprep.subr.mxu0 0.0
  %2118 = vmatpush1.msra.mxu0 0.0
  %2119 = vmatprep.subr.mxu0 0.0
  %2120 = vmatpush1.msra.mxu0 0.0
  %2121 = vmatprep.subr.mxu0 0.0
  %2122 = vmatpush1.msra.mxu0 0.0
  %2123 = vmatprep.subr.mxu0 0.0
  %2124 = vmatpush1.msra.mxu0 0.0
  %2125 = vmatprep.subr.mxu0 0.0
  %2126 = vmatpush1.msra.mxu0 0.0
  %2127 = vmatprep.subr.mxu0 0.0
  %2128 = vmatpush1.msra.mxu0 0.0
  %2129 = vmatprep.subr.mxu0 0.0
  %2130 = vmatpush1.msra.mxu0 0.0
  %2131 = vmatprep.subr.mxu0 0.0
  %2132 = vmatpush1.msra.mxu0 0.0
  %2133 = vmatprep.subr.mxu0 0.0
  %2134 = vmatpush1.msra.mxu0 0.0
  %2135 = vmatprep.subr.mxu0 0.0
  %2136 = vmatpush1.msra.mxu0 0.0
  %2137 = vmatprep.subr.mxu0 0.0
  %2138 = vmatpush1.msra.mxu0 0.0
  %2139 = vmatprep.subr.mxu0 0.0
  %2140 = vmatpush1.msra.mxu0 0.0
  %2141 = vmatprep.subr.mxu0 0.0
  %2142 = vmatpush1.msra.mxu0 0.0
  %2143 = vmatprep.subr.mxu0 0.0
  %2144 = vmatpush1.msra.mxu0 0.0
  %2145 = vmatprep.subr.mxu0 0.0
  %2146 = vmatpush1.msra.mxu0 0.0
  %2147 = vmatprep.subr.mxu0 0.0
  %2148 = vmatpush1.msra.mxu0 0.0
  %2149 = vmatprep.subr.mxu0 0.0
  %2150 = vmatpush1.msra.mxu0 0.0
  %2151 = vmatprep.subr.mxu0 0.0
  %2152 = vmatpush1.msra.mxu0 0.0
  %2153 = vmatprep.subr.mxu0 0.0
  %2154 = vmatpush1.msra.mxu0 0.0
  %2155 = vmatprep.subr.mxu0 0.0
  %2156 = vmatpush1.msra.mxu0 0.0
  %2157 = vmatprep.subr.mxu0 0.0
  %2158 = vmatpush1.msra.mxu0 0.0
  %2159 = vmatprep.subr.mxu0 0.0
  %2160 = vmatpush1.msra.mxu0 0.0
  %2161 = vmatprep.mubr.f32.mxu0 0.0
  %v2162 = vand.u32 %v1708, 4294901760
  %2163 = vmatmul.mubr.f32.gmra.mrb[0].mxu0 %v2162
  %v2164 = vpop.f32.mrb[0].mxu0
  %v2165 = vadd.f32 %v2070, %v2164
  %v2166 = vpop.f32.mrb[0].mxu0
  %2167 = vdwg.mxu0
  %2168 = vmatprep.subr.mxu0 0.0
  %v2169 = vand.u32 %v1699, 4294901760
  %2170 = vmatpush1.msra.mxu0 %v2169
  %2171 = vmatprep.subr.mxu0 0.0
  %v2172 = vand.u32 %v1700, 4294901760
  %2173 = vmatpush1.msra.mxu0 %v2172
  %2174 = vmatprep.subr.mxu0 0.0
  %v2175 = vand.u32 %v1701, 4294901760
  %2176 = vmatpush1.msra.mxu0 %v2175
  %2177 = vmatprep.subr.mxu0 0.0
  %v2178 = vand.u32 %v1702, 4294901760
  %2179 = vmatpush1.msra.mxu0 %v2178
  %2180 = vmatprep.subr.mxu0 0.0
  %v2181 = vand.u32 %v1703, 4294901760
  %2182 = vmatpush1.msra.mxu0 %v2181
  %2183 = vmatprep.subr.mxu0 0.0
  %v2184 = vand.u32 %v1704, 4294901760
  %2185 = vmatpush1.msra.mxu0 %v2184
  %2186 = vmatprep.subr.mxu0 0.0
  %v2187 = vand.u32 %v1705, 4294901760
  %2188 = vmatpush1.msra.mxu0 %v2187
  %2189 = vmatprep.subr.mxu0 0.0
  %v2190 = vand.u32 %v1706, 4294901760
  %2191 = vmatpush1.msra.mxu0 %v2190
  %2192 = vmatprep.subr.mxu0 0.0
  %2193 = vmatpush1.msra.mxu0 0.0
  %2194 = vmatprep.subr.mxu0 0.0
  %2195 = vmatpush1.msra.mxu0 0.0
  %2196 = vmatprep.subr.mxu0 0.0
  %2197 = vmatpush1.msra.mxu0 0.0
  %2198 = vmatprep.subr.mxu0 0.0
  %2199 = vmatpush1.msra.mxu0 0.0
  %2200 = vmatprep.subr.mxu0 0.0
  %2201 = vmatpush1.msra.mxu0 0.0
  %2202 = vmatprep.subr.mxu0 0.0
  %2203 = vmatpush1.msra.mxu0 0.0
  %2204 = vmatprep.subr.mxu0 0.0
  %2205 = vmatpush1.msra.mxu0 0.0
  %2206 = vmatprep.subr.mxu0 0.0
  %2207 = vmatpush1.msra.mxu0 0.0
  %2208 = vmatprep.subr.mxu0 0.0
  %2209 = vmatpush1.msra.mxu0 0.0
  %2210 = vmatprep.subr.mxu0 0.0
  %2211 = vmatpush1.msra.mxu0 0.0
  %2212 = vmatprep.subr.mxu0 0.0
  %2213 = vmatpush1.msra.mxu0 0.0
  %2214 = vmatprep.subr.mxu0 0.0
  %2215 = vmatpush1.msra.mxu0 0.0
  %2216 = vmatprep.subr.mxu0 0.0
  %2217 = vmatpush1.msra.mxu0 0.0
  %2218 = vmatprep.subr.mxu0 0.0
  %2219 = vmatpush1.msra.mxu0 0.0
  %2220 = vmatprep.subr.mxu0 0.0
  %2221 = vmatpush1.msra.mxu0 0.0
  %2222 = vmatprep.subr.mxu0 0.0
  %2223 = vmatpush1.msra.mxu0 0.0
  %2224 = vmatprep.subr.mxu0 0.0
  %2225 = vmatpush1.msra.mxu0 0.0
  %2226 = vmatprep.subr.mxu0 0.0
  %2227 = vmatpush1.msra.mxu0 0.0
  %2228 = vmatprep.subr.mxu0 0.0
  %2229 = vmatpush1.msra.mxu0 0.0
  %2230 = vmatprep.subr.mxu0 0.0
  %2231 = vmatpush1.msra.mxu0 0.0
  %2232 = vmatprep.subr.mxu0 0.0
  %2233 = vmatpush1.msra.mxu0 0.0
  %2234 = vmatprep.subr.mxu0 0.0
  %2235 = vmatpush1.msra.mxu0 0.0
  %2236 = vmatprep.subr.mxu0 0.0
  %2237 = vmatpush1.msra.mxu0 0.0
  %2238 = vmatprep.subr.mxu0 0.0
  %2239 = vmatpush1.msra.mxu0 0.0
  %2240 = vmatprep.mubr.f32.mxu0 0.0
  %v2241 = vand.u32 %v1708, 4294901760
  %2242 = vmatmul.mubr.f32.gmra.mrb[0].mxu0 %v2241
  %v2243 = vpop.f32.mrb[0].mxu0
  %v2244 = vadd.f32 %v2165, %v2243
  %v2245 = vpop.f32.mrb[0].mxu0
  %2246 = vdwg.mxu0
  %v2247 = vld [vmem:[%s5 + $0x3] sm:$0x1]
  %v2248 = vlaneseq
  %v2249 = vshrl.u32 %v2248, 7
  %v2250 = vsub.s32 0, %v2249
  %v2251 = vrot.slane %v2247, %v2250
  %v2252 = vadd.f32 %v2244, %v2251
  %v2253 = vtanh.pop %v2252
  %vm2254 = vcmask 15360
  %2255 = vst.msk [vmem:[%s6] sm:$0xff] %vm2254, %v2253
  // Predicated region
  $region26: #{_forward_jit.1} parent=0 // pred_check
    _
  $region27: #{_forward_jit.1} parent=0 // pred_check_branch
    %2257 = sbr.rel (0) target = $region29
  $region28: #{_forward_jit.1} parent=0 // pred_region
    _
  $region29: #{_forward_jit.1} parent=0 // pred_fallthru
    _
  // Predicated region
  $region30: #{_forward_jit.1} parent=0 // pred_check
    _
  $region31: #{_forward_jit.1} parent=0 // pred_check_branch
    %2259 = sbr.rel (0) target = $region33
  $region32: #{_forward_jit.1} parent=0 // pred_region
    _
  $region33: #{_forward_jit.1} parent=0 // pred_fallthru
    _

</llo_original>
